<compile_context>
chip_gen: v7x
topology: tpu7x:2x2x1
jax: 0.10.0
libtpu: 0.0.40
codegen_flags: <defaults>
</compile_context>

<pallas_src>
import jax
import jax.numpy as jnp
from jax.experimental import pallas as pl
from jax.experimental.pallas import tpu as pltpu


# ----------------------------------------------------------------------------
# Kernel 1: one bidirectional, length-masked GRU layer (time-major).
#   inputs : x (T, Bt, In), lengths (Bt, 1),
#            W_ih fwd|bwd pre-transposed+fused (In, 6H) bf16,
#            fused input bias (1, 6H), W_hh fwd/bwd (H, 3H),
#            b_hh n-slice fwd/bwd (1, H)
#   outputs: out (T, Bt, 2H)  [lanes 0:H fwd, H:2H bwd],  h_n (2, Bt, H)
#   scratch: xg (T, Bt, 6H) f32 — precomputed input-gate projections.
# ----------------------------------------------------------------------------
def _gru_layer_kernel(x_ref, len_ref, wih_ref, bcat_ref, whhf_ref, whhb_ref,
                      bhnf_ref, bhnb_ref, out_ref, hn_ref, xg_ref):
    T, Bt, In = x_ref.shape
    H = whhf_ref.shape[0]
    H3 = 3 * H

    # ---- fused fwd+bwd input projection: one big bf16 MXU matmul, f32 acc.
    x2 = x_ref[...].reshape(T * Bt, In).astype(jnp.bfloat16)
    xg = jnp.dot(x2, wih_ref[...], preferred_element_type=jnp.float32)
    xg = xg + bcat_ref[...]                       # b_ih + b_hh[r,z] folded in
    xg_ref[...] = xg.reshape(T, Bt, 2 * H3)

    # ---- loop invariants hoisted off the serial critical path.
    lens = len_ref[...]                                       # (Bt, 1) int32
    w_hh_f = whhf_ref[...]                                    # (H, 3H)
    w_hh_b = whhb_ref[...]
    b_hn_f = jnp.broadcast_to(bhnf_ref[...], (Bt, H))         # hoisted broadcast
    b_hn_b = jnp.broadcast_to(bhnb_ref[...], (Bt, H))
    h0 = jnp.zeros((Bt, H), jnp.float32)

    def step(t, carry):
        h_f, h_b = carry
        tb = T - 1 - t
        xg_f = xg_ref[t, :, 0:H3]                             # (Bt, 3H) fwd gates
        xg_b = xg_ref[tb, :, H3:2 * H3]                       # (Bt, 3H) bwd gates

        # Two small recurrent matmuls issued back-to-back so the fwd/bwd MXU
        # ops and their VPU gate math pipeline against each other.
        hg_f = jnp.dot(h_f, w_hh_f, preferred_element_type=jnp.float32)
        hg_b = jnp.dot(h_b, w_hh_b, preferred_element_type=jnp.float32)

        r_f = jax.nn.sigmoid(xg_f[:, 0:H] + hg_f[:, 0:H])
        z_f = jax.nn.sigmoid(xg_f[:, H:2 * H] + hg_f[:, H:2 * H])
        n_f = jnp.tanh(xg_f[:, 2 * H:H3] + r_f * (hg_f[:, 2 * H:H3] + b_hn_f))
        hf_new = (1.0 - z_f) * n_f + z_f * h_f

        r_b = jax.nn.sigmoid(xg_b[:, 0:H] + hg_b[:, 0:H])
        z_b = jax.nn.sigmoid(xg_b[:, H:2 * H] + hg_b[:, H:2 * H])
        n_b = jnp.tanh(xg_b[:, 2 * H:H3] + r_b * (hg_b[:, 2 * H:H3] + b_hn_b))
        hb_new = (1.0 - z_b) * n_b + z_b * h_b

        v_f = t < lens                                        # (Bt, 1) bool
        v_b = tb < lens
        h_f = jnp.where(v_f, hf_new, h_f)                     # hold h_n past length
        h_b = jnp.where(v_b, hb_new, h_b)
        # Direct stores into disjoint lane halves of out_ref (no stack/concat).
        out_ref[t, :, 0:H] = jnp.where(v_f, hf_new, 0.0)      # padded rows -> 0
        out_ref[tb, :, H:2 * H] = jnp.where(v_b, hb_new, 0.0)
        return h_f, h_b

    h_f, h_b = jax.lax.fori_loop(0, T, step, (h0, h0))
    hn_ref[0, :, :] = h_f
    hn_ref[1, :, :] = h_b


def _batch_block(B):
    return B if (B <= 8 or B % 8) else 8


def gru_layer(x_tm, lens2d, p):
    """One bidirectional GRU layer. x_tm: (T, B, In) f32 time-major."""
    T, B, In = x_tm.shape
    H = p["w_hh_f"].shape[0]
    Bt = _batch_block(B)

    def full2d(shape):
        return pl.BlockSpec(shape, lambda b: (0, 0))

    return pl.pallas_call(
        _gru_layer_kernel,
        grid=(B // Bt,),
        in_specs=[
            pl.BlockSpec((T, Bt, In), lambda b: (0, b, 0)),   # x (time-major)
            pl.BlockSpec((Bt, 1), lambda b: (b, 0)),          # lengths
            full2d((In, 6 * H)),                              # W_ih fwd|bwd (bf16)
            full2d((1, 6 * H)),                               # fused input bias
            full2d((H, 3 * H)),                               # W_hh fwd
            full2d((H, 3 * H)),                               # W_hh bwd
            full2d((1, H)),                                   # b_hh n-slice fwd
            full2d((1, H)),                                   # b_hh n-slice bwd
        ],
        out_specs=(
            pl.BlockSpec((T, Bt, 2 * H), lambda b: (0, b, 0)),
            pl.BlockSpec((2, Bt, H), lambda b: (0, b, 0)),
        ),
        out_shape=(jax.ShapeDtypeStruct((T, B, 2 * H), jnp.float32),
                   jax.ShapeDtypeStruct((2, B, H), jnp.float32)),
        scratch_shapes=[pltpu.VMEM((T, Bt, 6 * H), jnp.float32)],
        compiler_params=pltpu.CompilerParams(
            dimension_semantics=("parallel",)),
    )(x_tm, lens2d, p["w_ih_cat"], p["b_cat"], p["w_hh_f"], p["w_hh_b"],
      p["b_hh_n_f"], p["b_hh_n_b"])


# ----------------------------------------------------------------------------
# Kernel 2: positional/length gate, time-blocked:
#   gate = sigmoid(pos_e @ Wp + len_e @ Wl + rnn @ Wo + b);  out = rnn * gate
# ----------------------------------------------------------------------------
def _gate_kernel(rnn_ref, pos_ref, lene_ref, wp_ref, wl_ref, wo_ref, b_ref,
                 o_ref):
    rnn = rnn_ref[...]                                        # (Tt, B, 2H) f32
    Tt, B, C = rnn.shape
    pos_g = jnp.dot(pos_ref[...].astype(jnp.bfloat16), wp_ref[...],
                    preferred_element_type=jnp.float32)       # (Tt, 2H)
    len_g = jnp.dot(lene_ref[...].astype(jnp.bfloat16), wl_ref[...],
                    preferred_element_type=jnp.float32)       # (B, 2H)
    out_g = jnp.dot(rnn.reshape(Tt * B, C).astype(jnp.bfloat16), wo_ref[...],
                    preferred_element_type=jnp.float32).reshape(Tt, B, C)
    logits = out_g + pos_g[:, None, :] + len_g[None, :, :] + b_ref[...]
    o_ref[...] = rnn * jax.nn.sigmoid(logits)


def _time_block(T, max_block=256):
    if T <= max_block:
        return T
    for cand in range(max_block, 7, -1):
        if T % cand == 0 and cand % 8 == 0:
            return cand
    return T


def gated_output(rnn_tm, pos_embed, len_embed, wp, wl, wo, b):
    T, B, C = rnn_tm.shape
    E = pos_embed.shape[1]
    Tt = _time_block(T)

    def full2d(shape):
        return pl.BlockSpec(shape, lambda i: (0, 0))

    return pl.pallas_call(
        _gate_kernel,
        grid=(T // Tt,),
        in_specs=[
            pl.BlockSpec((Tt, B, C), lambda i: (i, 0, 0)),    # rnn output
            pl.BlockSpec((Tt, E), lambda i: (i, 0)),          # pos embeddings
            full2d((B, E)),                                   # len embeddings
            full2d((E, C)), full2d((E, C)), full2d((C, C)),   # gate weights (bf16)
            full2d((1, C)),                                   # gate bias
        ],
        out_specs=pl.BlockSpec((Tt, B, C), lambda i: (i, 0, 0)),
        out_shape=jax.ShapeDtypeStruct((T, B, C), jnp.float32),
        compiler_params=pltpu.CompilerParams(
            dimension_semantics=("parallel",)),
    )(rnn_tm, pos_embed, len_embed, wp, wl, wo, b)


# ----------------------------------------------------------------------------
# Parameter init: draw PyTorch-layout weights (W_ih (3H,In), W_hh (3H,H),
# gate order [r,z,n]), then re-pack them kernel-ready once (pre-transposed,
# fwd/bwd fused, r/z b_hh folded into the input bias, bf16 MXU copies).
# ----------------------------------------------------------------------------
def init_params(key, vocab_size, embed_size, hidden_size, num_layers, pos_size):
    def norm(k, shape, scale=0.1):
        return (scale * jax.random.normal(k, shape)).astype(jnp.float32)

    keys = iter(jax.random.split(key, 256))
    E, H = embed_size, hidden_size
    params = {
        "embedding": norm(next(keys), (vocab_size, E)),
        "pos_embedding": norm(next(keys), (pos_size, E)),
        "len_embedding": norm(next(keys), (pos_size, E)),
    }

    gru = []
    for layer in range(num_layers):
        in_size = E if layer == 0 else 2 * H
        dirs = {}
        for d in ("fwd", "bwd"):
            dirs[d] = {
                "w_ih": norm(next(keys), (3 * H, in_size)),
                "w_hh": norm(next(keys), (3 * H, H)),
                "b_ih": norm(next(keys), (3 * H,)),
                "b_hh": norm(next(keys), (3 * H,)),
            }

        def fused_bias(p):  # b_ih + [b_hh_r, b_hh_z, 0]  (b_hh_n stays separate)
            return p["b_ih"] + jnp.concatenate(
                [p["b_hh"][:2 * H], jnp.zeros((H,), jnp.float32)])

        gru.append({
            "w_ih_cat": jnp.concatenate(
                [dirs["fwd"]["w_ih"].T, dirs["bwd"]["w_ih"].T],
                axis=1).astype(jnp.bfloat16),                       # (In, 6H)
            "b_cat": jnp.concatenate(
                [fused_bias(dirs["fwd"]), fused_bias(dirs["bwd"])])[None, :],
            "w_hh_f": dirs["fwd"]["w_hh"].T,                        # (H, 3H)
            "w_hh_b": dirs["bwd"]["w_hh"].T,                        # (H, 3H)
            "b_hh_n_f": dirs["fwd"]["b_hh"][2 * H:][None, :],       # (1, H)
            "b_hh_n_b": dirs["bwd"]["b_hh"][2 * H:][None, :],       # (1, H)
        })
    params["gru"] = gru

    # nn.Linear(2E + 2H -> 2H); columns ordered [pos_embed | len_embed | rnn_out]
    W = norm(next(keys), (2 * H, 2 * E + 2 * H))
    b = norm(next(keys), (2 * H,))
    params["gate_wp"] = W[:, :E].T.astype(jnp.bfloat16)             # (E, 2H)
    params["gate_wl"] = W[:, E:2 * E].T.astype(jnp.bfloat16)        # (E, 2H)
    params["gate_wo"] = W[:, 2 * E:].T.astype(jnp.bfloat16)         # (2H, 2H)
    params["gate_b"] = b[None, :]                                   # (1, 2H)
    return params


def pos_gated_encoder_forward(params, token_ids, lengths):
    """token_ids (B,T) int32, lengths (B,) int32 ->
       outputs (B, T, 2H) f32, h_n (2*num_layers, B, H) f32."""
    B, T = token_ids.shape
    # Embedding gathers + layout plumbing stay in plain XLA.
    x = jnp.take(params["embedding"], token_ids, axis=0)            # (B,T,E)
    x_tm = jnp.swapaxes(x, 0, 1)                                    # (T,B,E)
    lens2d = lengths.astype(jnp.int32)[:, None]                     # (B,1)

    # TODO(synk): inter-layer rnn_dropout (p=0.2) is train-only; eval assumed.
    # TODO(synk): non-None initial `hidden` not supported (h_0 = 0, as when
    # the reference module is called with hidden=None).
    layer_in = x_tm
    h_ns = []
    for layer_p in params["gru"]:
        out_tm, hn = gru_layer(layer_in, lens2d, layer_p)
        h_ns.append(hn)
        layer_in = out_tm
    h_n = jnp.concatenate(h_ns, axis=0)                             # (2L,B,H)

    len_embed = jnp.take(params["len_embedding"], lengths, axis=0)  # (B,E)
    pos_embed = params["pos_embedding"][:T]                         # (T,E)
    gated_tm = gated_output(layer_in, pos_embed, len_embed,
                            params["gate_wp"], params["gate_wl"],
                            params["gate_wo"], params["gate_b"])    # (T,B,2H)
    return jnp.swapaxes(gated_tm, 0, 1), h_n                        # (B,T,2H)


if __name__ == "__main__":
    key = jax.random.PRNGKey(0)
    k_params, k_ids = jax.random.split(key)

    batch, seq_len = 2, 8
    embed_size, hidden_size, num_layers = 16, 16, 2
    vocab_size, pos_size = 50, 120

    params = init_params(k_params, vocab_size, embed_size, hidden_size,
                         num_layers, pos_size)
    token_ids = jax.random.randint(k_ids, (batch, seq_len), 0, vocab_size,
                                   dtype=jnp.int32)
    lengths = jnp.array([seq_len, 5], dtype=jnp.int32)

    fwd = jax.jit(pos_gated_encoder_forward)
    outputs, h_n = fwd(params, token_ids, lengths)
    jax.block_until_ready((outputs, h_n))

    assert outputs.shape == (batch, seq_len, 2 * hidden_size)
    assert h_n.shape == (2 * num_layers, batch, hidden_size)
    assert bool(jnp.all(jnp.isfinite(outputs))) and bool(jnp.all(jnp.isfinite(h_n)))
    # packed-sequence semantics: positions past each sequence length are zero.
    assert bool(jnp.all(outputs[1, 5:] == 0.0))
    print("KERNEL_OK")
</pallas_src>

<mosaic_0001>
module attributes {stable_mosaic.version = 11 : i64} {
  func.func @_gru_layer_kernel(%arg0: i32, %arg1: memref<8x2x32xf32, #tpu.memory_space<vmem>>, %arg2: memref<2x1xi32, #tpu.memory_space<vmem>>, %arg3: memref<32x96xbf16, #tpu.memory_space<vmem>>, %arg4: memref<1x96xf32, #tpu.memory_space<vmem>>, %arg5: memref<16x48xf32, #tpu.memory_space<vmem>>, %arg6: memref<16x48xf32, #tpu.memory_space<vmem>>, %arg7: memref<1x16xf32, #tpu.memory_space<vmem>>, %arg8: memref<1x16xf32, #tpu.memory_space<vmem>>, %arg9: memref<8x2x32xf32, #tpu.memory_space<vmem>>, %arg10: memref<2x2x16xf32, #tpu.memory_space<vmem>>, %arg11: memref<8x2x96xf32, #tpu.memory_space<vmem>>) attributes {dimension_semantics = [#tpu.dimension_semantics<parallel>], iteration_bounds = array<i64: 1>, scalar_prefetch = 0 : i64, scratch_operands = 1 : i64, tpu.core_type = #tpu.core_type<tc>, window_params = [{transform_indices = @transform_0, window_bounds = array<i64: 8, 2, 32>}, {transform_indices = @transform_1, window_bounds = array<i64: 2, 1>}, {pipeline_mode = #tpu.pipeline_mode<synchronous>, transform_indices = @transform_2, window_bounds = array<i64: 32, 96>}, {pipeline_mode = #tpu.pipeline_mode<synchronous>, transform_indices = @transform_3, window_bounds = array<i64: 1, 96>}, {pipeline_mode = #tpu.pipeline_mode<synchronous>, transform_indices = @transform_4, window_bounds = array<i64: 16, 48>}, {pipeline_mode = #tpu.pipeline_mode<synchronous>, transform_indices = @transform_5, window_bounds = array<i64: 16, 48>}, {pipeline_mode = #tpu.pipeline_mode<synchronous>, transform_indices = @transform_6, window_bounds = array<i64: 1, 16>}, {pipeline_mode = #tpu.pipeline_mode<synchronous>, transform_indices = @transform_7, window_bounds = array<i64: 1, 16>}, {transform_indices = @transform_8, window_bounds = array<i64: 8, 2, 32>}, {transform_indices = @transform_9, window_bounds = array<i64: 2, 2, 16>}]} {
    %c0 = arith.constant 0 : index
    %c0_0 = arith.constant 0 : index
    %c0_1 = arith.constant 0 : index
    %0 = vector.load %arg1[%c0, %c0_0, %c0_1] : memref<8x2x32xf32, #tpu.memory_space<vmem>>, vector<8x2x32xf32>
    %1 = vector.shape_cast %0 : vector<8x2x32xf32> to vector<16x32xf32>
    %2 = arith.truncf %1 : vector<16x32xf32> to vector<16x32xbf16>
    %c0_2 = arith.constant 0 : index
    %c0_3 = arith.constant 0 : index
    %3 = vector.load %arg3[%c0_2, %c0_3] : memref<32x96xbf16, #tpu.memory_space<vmem>>, vector<32x96xbf16>
    %cst = arith.constant dense<0.000000e+00> : vector<16x96xf32>
    %4 = tpu.matmul %2, %3, %cst {dimension_numbers = #tpu.dot_dimension_numbers<[1], [0], [0], [1], [0, 0, 1, 1], [], []>} : vector<16x32xbf16>, vector<32x96xbf16>, vector<16x96xf32> -> vector<16x96xf32>
    %c0_4 = arith.constant 0 : index
    %c0_5 = arith.constant 0 : index
    %5 = vector.load %arg4[%c0_4, %c0_5] : memref<1x96xf32, #tpu.memory_space<vmem>>, vector<1x96xf32>
    %6 = vector.broadcast %5 : vector<1x96xf32> to vector<16x96xf32>
    %7 = arith.addf %4, %6 : vector<16x96xf32>
    %8 = vector.shape_cast %7 : vector<16x96xf32> to vector<8x2x96xf32>
    %c0_6 = arith.constant 0 : index
    %c0_7 = arith.constant 0 : index
    %c0_8 = arith.constant 0 : index
    %9 = vector.load %arg11[%c0_6, %c0_7, %c0_8] : memref<8x2x96xf32, #tpu.memory_space<vmem>>, vector<8x2x96xf32>
    tpu.vector_store %arg11[%c0_6, %c0_7, %c0_8], %8 {strides = array<i32>} : memref<8x2x96xf32, #tpu.memory_space<vmem>>, vector<8x2x96xf32>,
    %c0_9 = arith.constant 0 : index
    %c0_10 = arith.constant 0 : index
    %10 = vector.load %arg2[%c0_9, %c0_10] : memref<2x1xi32, #tpu.memory_space<vmem>>, vector<2x1xi32>
    %c0_11 = arith.constant 0 : index
    %c0_12 = arith.constant 0 : index
    %11 = vector.load %arg5[%c0_11, %c0_12] : memref<16x48xf32, #tpu.memory_space<vmem>>, vector<16x48xf32>
    %c0_13 = arith.constant 0 : index
    %c0_14 = arith.constant 0 : index
    %12 = vector.load %arg6[%c0_13, %c0_14] : memref<16x48xf32, #tpu.memory_space<vmem>>, vector<16x48xf32>
    %c0_15 = arith.constant 0 : index
    %c0_16 = arith.constant 0 : index
    %13 = vector.load %arg7[%c0_15, %c0_16] : memref<1x16xf32, #tpu.memory_space<vmem>>, vector<1x16xf32>
    %14 = vector.shape_cast %13 : vector<1x16xf32> to vector<1x16xf32>
    %15 = vector.broadcast %14 : vector<1x16xf32> to vector<2x16xf32>
    %c0_17 = arith.constant 0 : index
    %c0_18 = arith.constant 0 : index
    %16 = vector.load %arg8[%c0_17, %c0_18] : memref<1x16xf32, #tpu.memory_space<vmem>>, vector<1x16xf32>
    %17 = vector.shape_cast %16 : vector<1x16xf32> to vector<1x16xf32>
    %18 = vector.broadcast %17 : vector<1x16xf32> to vector<2x16xf32>
    %cst_19 = arith.constant 0.000000e+00 : f32
    %19 = vector.broadcast %cst_19 : f32 to vector<2x16xf32>
    %c0_i32 = arith.constant 0 : i32
    %c8_i32 = arith.constant 8 : i32
    %20 = arith.addi %c0_i32, %c8_i32 : i32
    %c1_i32 = arith.constant 1 : i32
    %21:2 = scf.for %arg12 = %c0_i32 to %20 step %c1_i32 iter_args(%arg13 = %19, %arg14 = %19) -> (vector<2x16xf32>, vector<2x16xf32>)  : i32 {
      %c7_i32 = arith.constant 7 : i32
      %28 = arith.subi %c7_i32, %arg12 : i32
      %29 = arith.index_cast %arg12 : i32 to index
      %c0_26 = arith.constant 0 : index
      %c0_27 = arith.constant 0 : index
      %30 = vector.load %arg11[%29, %c0_26, %c0_27] : memref<8x2x96xf32, #tpu.memory_space<vmem>>, vector<1x2x48xf32>
      %31 = vector.shape_cast %30 : vector<1x2x48xf32> to vector<2x48xf32>
      %32 = arith.index_cast %28 : i32 to index
      %c0_28 = arith.constant 0 : index
      %c48 = arith.constant 48 : index
      %33 = vector.load %arg11[%32, %c0_28, %c48] : memref<8x2x96xf32, #tpu.memory_space<vmem>>, vector<1x2x48xf32>
      %34 = vector.shape_cast %33 : vector<1x2x48xf32> to vector<2x48xf32>
      %cst_29 = arith.constant dense<0.000000e+00> : vector<2x48xf32>
      %35 = tpu.matmul %arg13, %11, %cst_29 {dimension_numbers = #tpu.dot_dimension_numbers<[1], [0], [0], [1], [0, 0, 1, 1], [], []>} : vector<2x16xf32>, vector<16x48xf32>, vector<2x48xf32> -> vector<2x48xf32>
      %cst_30 = arith.constant dense<0.000000e+00> : vector<2x48xf32>
      %36 = tpu.matmul %arg14, %12, %cst_30 {dimension_numbers = #tpu.dot_dimension_numbers<[1], [0], [0], [1], [0, 0, 1, 1], [], []>} : vector<2x16xf32>, vector<16x48xf32>, vector<2x48xf32> -> vector<2x48xf32>
      %37 = vector.extract_strided_slice %31 {offsets = [0, 0], sizes = [2, 16], strides = [1, 1]} : vector<2x48xf32> to vector<2x16xf32>
      %38 = vector.extract_strided_slice %35 {offsets = [0, 0], sizes = [2, 16], strides = [1, 1]} : vector<2x48xf32> to vector<2x16xf32>
      %39 = arith.addf %37, %38 : vector<2x16xf32>
      %40 = arith.negf %39 : vector<2x16xf32>
      %41 = math.exp %40 : vector<2x16xf32>
      %cst_31 = arith.constant 1.000000e+00 : f32
      %42 = vector.broadcast %cst_31 : f32 to vector<2x16xf32>
      %43 = arith.addf %42, %41 : vector<2x16xf32>
      %44 = arith.divf %42, %43 : vector<2x16xf32>
      %45 = vector.extract_strided_slice %31 {offsets = [0, 16], sizes = [2, 16], strides = [1, 1]} : vector<2x48xf32> to vector<2x16xf32>
      %46 = vector.extract_strided_slice %35 {offsets = [0, 16], sizes = [2, 16], strides = [1, 1]} : vector<2x48xf32> to vector<2x16xf32>
      %47 = arith.addf %45, %46 : vector<2x16xf32>
      %48 = arith.negf %47 : vector<2x16xf32>
      %49 = math.exp %48 : vector<2x16xf32>
      %cst_32 = arith.constant 1.000000e+00 : f32
      %50 = vector.broadcast %cst_32 : f32 to vector<2x16xf32>
      %51 = arith.addf %50, %49 : vector<2x16xf32>
      %52 = arith.divf %50, %51 : vector<2x16xf32>
      %53 = vector.extract_strided_slice %31 {offsets = [0, 32], sizes = [2, 16], strides = [1, 1]} : vector<2x48xf32> to vector<2x16xf32>
      %54 = vector.extract_strided_slice %35 {offsets = [0, 32], sizes = [2, 16], strides = [1, 1]} : vector<2x48xf32> to vector<2x16xf32>
      %55 = arith.addf %54, %15 : vector<2x16xf32>
      %56 = arith.mulf %44, %55 : vector<2x16xf32>
      %57 = arith.addf %53, %56 : vector<2x16xf32>
      %58 = math.tanh %57 : vector<2x16xf32>
      %cst_33 = arith.constant 1.000000e+00 : f32
      %59 = vector.broadcast %cst_33 : f32 to vector<2x16xf32>
      %60 = arith.subf %59, %52 : vector<2x16xf32>
      %61 = arith.mulf %60, %58 : vector<2x16xf32>
      %62 = arith.mulf %52, %arg13 : vector<2x16xf32>
      %63 = arith.addf %61, %62 : vector<2x16xf32>
      %64 = vector.extract_strided_slice %34 {offsets = [0, 0], sizes = [2, 16], strides = [1, 1]} : vector<2x48xf32> to vector<2x16xf32>
      %65 = vector.extract_strided_slice %36 {offsets = [0, 0], sizes = [2, 16], strides = [1, 1]} : vector<2x48xf32> to vector<2x16xf32>
      %66 = arith.addf %64, %65 : vector<2x16xf32>
      %67 = arith.negf %66 : vector<2x16xf32>
      %68 = math.exp %67 : vector<2x16xf32>
      %cst_34 = arith.constant 1.000000e+00 : f32
      %69 = vector.broadcast %cst_34 : f32 to vector<2x16xf32>
      %70 = arith.addf %69, %68 : vector<2x16xf32>
      %71 = arith.divf %69, %70 : vector<2x16xf32>
      %72 = vector.extract_strided_slice %34 {offsets = [0, 16], sizes = [2, 16], strides = [1, 1]} : vector<2x48xf32> to vector<2x16xf32>
      %73 = vector.extract_strided_slice %36 {offsets = [0, 16], sizes = [2, 16], strides = [1, 1]} : vector<2x48xf32> to vector<2x16xf32>
      %74 = arith.addf %72, %73 : vector<2x16xf32>
      %75 = arith.negf %74 : vector<2x16xf32>
      %76 = math.exp %75 : vector<2x16xf32>
      %cst_35 = arith.constant 1.000000e+00 : f32
      %77 = vector.broadcast %cst_35 : f32 to vector<2x16xf32>
      %78 = arith.addf %77, %76 : vector<2x16xf32>
      %79 = arith.divf %77, %78 : vector<2x16xf32>
      %80 = vector.extract_strided_slice %34 {offsets = [0, 32], sizes = [2, 16], strides = [1, 1]} : vector<2x48xf32> to vector<2x16xf32>
      %81 = vector.extract_strided_slice %36 {offsets = [0, 32], sizes = [2, 16], strides = [1, 1]} : vector<2x48xf32> to vector<2x16xf32>
      %82 = arith.addf %81, %18 : vector<2x16xf32>
      %83 = arith.mulf %71, %82 : vector<2x16xf32>
      %84 = arith.addf %80, %83 : vector<2x16xf32>
      %85 = math.tanh %84 : vector<2x16xf32>
      %cst_36 = arith.constant 1.000000e+00 : f32
      %86 = vector.broadcast %cst_36 : f32 to vector<2x16xf32>
      %87 = arith.subf %86, %79 : vector<2x16xf32>
      %88 = arith.mulf %87, %85 : vector<2x16xf32>
      %89 = arith.mulf %79, %arg14 : vector<2x16xf32>
      %90 = arith.addf %88, %89 : vector<2x16xf32>
      %91 = vector.broadcast %arg12 : i32 to vector<2x1xi32>
      %92 = arith.cmpi slt, %91, %10 : vector<2x1xi32>
      %93 = vector.broadcast %28 : i32 to vector<2x1xi32>
      %94 = arith.cmpi slt, %93, %10 : vector<2x1xi32>
      %95 = vector.shape_cast %92 : vector<2x1xi1> to vector<2x1xi1>
      %96 = vector.broadcast %95 : vector<2x1xi1> to vector<2x16xi1>
      %97 = arith.select %96, %63, %arg13 : vector<2x16xi1>, vector<2x16xf32>
      %98 = vector.shape_cast %94 : vector<2x1xi1> to vector<2x1xi1>
      %99 = vector.broadcast %98 : vector<2x1xi1> to vector<2x16xi1>
      %100 = arith.select %99, %90, %arg14 : vector<2x16xi1>, vector<2x16xf32>
      %cst_37 = arith.constant 0.000000e+00 : f32
      %101 = vector.shape_cast %92 : vector<2x1xi1> to vector<2x1xi1>
      %102 = vector.broadcast %101 : vector<2x1xi1> to vector<2x16xi1>
      %103 = vector.broadcast %cst_37 : f32 to vector<2x16xf32>
      %104 = arith.select %102, %63, %103 : vector<2x16xi1>, vector<2x16xf32>
      %105 = arith.index_cast %arg12 : i32 to index
      %c0_38 = arith.constant 0 : index
      %c0_39 = arith.constant 0 : index
      %106 = vector.load %arg9[%105, %c0_38, %c0_39] : memref<8x2x32xf32, #tpu.memory_space<vmem>>, vector<1x2x16xf32>
      %107 = vector.shape_cast %106 : vector<1x2x16xf32> to vector<2x16xf32>
      %108 = vector.shape_cast %104 : vector<2x16xf32> to vector<1x2x16xf32>
      tpu.vector_store %arg9[%105, %c0_38, %c0_39], %108 {strides = array<i32>} : memref<8x2x32xf32, #tpu.memory_space<vmem>>, vector<1x2x16xf32>,
      %cst_40 = arith.constant 0.000000e+00 : f32
      %109 = vector.shape_cast %94 : vector<2x1xi1> to vector<2x1xi1>
      %110 = vector.broadcast %109 : vector<2x1xi1> to vector<2x16xi1>
      %111 = vector.broadcast %cst_40 : f32 to vector<2x16xf32>
      %112 = arith.select %110, %90, %111 : vector<2x16xi1>, vector<2x16xf32>
      %113 = arith.index_cast %28 : i32 to index
      %c0_41 = arith.constant 0 : index
      %c16 = arith.constant 16 : index
      %114 = vector.load %arg9[%113, %c0_41, %c16] : memref<8x2x32xf32, #tpu.memory_space<vmem>>, vector<1x2x16xf32>
      %115 = vector.shape_cast %114 : vector<1x2x16xf32> to vector<2x16xf32>
      %116 = vector.shape_cast %112 : vector<2x16xf32> to vector<1x2x16xf32>
      tpu.vector_store %arg9[%113, %c0_41, %c16], %116 {strides = array<i32>} : memref<8x2x32xf32, #tpu.memory_space<vmem>>, vector<1x2x16xf32>,
      scf.yield %97, %100 : vector<2x16xf32>, vector<2x16xf32>
    }
    %c8_i32_20 = arith.constant 8 : i32
    %c0_21 = arith.constant 0 : index
    %c0_22 = arith.constant 0 : index
    %c0_23 = arith.constant 0 : index
    %22 = vector.load %arg10[%c0_21, %c0_22, %c0_23] : memref<2x2x16xf32, #tpu.memory_space<vmem>>, vector<1x2x16xf32>
    %23 = vector.shape_cast %22 : vector<1x2x16xf32> to vector<2x16xf32>
    %24 = vector.shape_cast %21#0 : vector<2x16xf32> to vector<1x2x16xf32>
    tpu.vector_store %arg10[%c0_21, %c0_22, %c0_23], %24 {strides = array<i32>} : memref<2x2x16xf32, #tpu.memory_space<vmem>>, vector<1x2x16xf32>,
    %c1 = arith.constant 1 : index
    %c0_24 = arith.constant 0 : index
    %c0_25 = arith.constant 0 : index
    %25 = vector.load %arg10[%c1, %c0_24, %c0_25] : memref<2x2x16xf32, #tpu.memory_space<vmem>>, vector<1x2x16xf32>
    %26 = vector.shape_cast %25 : vector<1x2x16xf32> to vector<2x16xf32>
    %27 = vector.shape_cast %21#1 : vector<2x16xf32> to vector<1x2x16xf32>
    tpu.vector_store %arg10[%c1, %c0_24, %c0_25], %27 {strides = array<i32>} : memref<2x2x16xf32, #tpu.memory_space<vmem>>, vector<1x2x16xf32>,
    return
  }
  func.func @transform_0(%arg0: i32) -> (i32, i32, i32) {
    %c0_i32 = arith.constant 0 : i32
    %c0_i32_0 = arith.constant 0 : i32
    %c0_i32_1 = arith.constant 0 : i32
    return %c0_i32, %arg0, %c0_i32_0 : i32, i32, i32
  }
  func.func @transform_1(%arg0: i32) -> (i32, i32) {
    %c0_i32 = arith.constant 0 : i32
    %c0_i32_0 = arith.constant 0 : i32
    return %arg0, %c0_i32 : i32, i32
  }
  func.func @transform_2(%arg0: i32) -> (i32, i32) {
    %c0_i32 = arith.constant 0 : i32
    %c0_i32_0 = arith.constant 0 : i32
    %c0_i32_1 = arith.constant 0 : i32
    return %c0_i32, %c0_i32_0 : i32, i32
  }
  func.func @transform_3(%arg0: i32) -> (i32, i32) {
    %c0_i32 = arith.constant 0 : i32
    %c0_i32_0 = arith.constant 0 : i32
    %c0_i32_1 = arith.constant 0 : i32
    return %c0_i32, %c0_i32_0 : i32, i32
  }
  func.func @transform_4(%arg0: i32) -> (i32, i32) {
    %c0_i32 = arith.constant 0 : i32
    %c0_i32_0 = arith.constant 0 : i32
    %c0_i32_1 = arith.constant 0 : i32
    return %c0_i32, %c0_i32_0 : i32, i32
  }
  func.func @transform_5(%arg0: i32) -> (i32, i32) {
    %c0_i32 = arith.constant 0 : i32
    %c0_i32_0 = arith.constant 0 : i32
    %c0_i32_1 = arith.constant 0 : i32
    return %c0_i32, %c0_i32_0 : i32, i32
  }
  func.func @transform_6(%arg0: i32) -> (i32, i32) {
    %c0_i32 = arith.constant 0 : i32
    %c0_i32_0 = arith.constant 0 : i32
    %c0_i32_1 = arith.constant 0 : i32
    return %c0_i32, %c0_i32_0 : i32, i32
  }
  func.func @transform_7(%arg0: i32) -> (i32, i32) {
    %c0_i32 = arith.constant 0 : i32
    %c0_i32_0 = arith.constant 0 : i32
    %c0_i32_1 = arith.constant 0 : i32
    return %c0_i32, %c0_i32_0 : i32, i32
  }
  func.func @transform_8(%arg0: i32) -> (i32, i32, i32) {
    %c0_i32 = arith.constant 0 : i32
    %c0_i32_0 = arith.constant 0 : i32
    %c0_i32_1 = arith.constant 0 : i32
    return %c0_i32, %arg0, %c0_i32_0 : i32, i32, i32
  }
  func.func @transform_9(%arg0: i32) -> (i32, i32, i32) {
    %c0_i32 = arith.constant 0 : i32
    %c0_i32_0 = arith.constant 0 : i32
    %c0_i32_1 = arith.constant 0 : i32
    return %c0_i32, %arg0, %c0_i32_0 : i32, i32, i32
  }
}

module attributes {stable_mosaic.version = 11 : i64} {
  func.func @_gru_layer_kernel(%arg0: i32, %arg1: memref<8x2x16xf32, #tpu.memory_space<vmem>>, %arg2: memref<2x1xi32, #tpu.memory_space<vmem>>, %arg3: memref<16x96xbf16, #tpu.memory_space<vmem>>, %arg4: memref<1x96xf32, #tpu.memory_space<vmem>>, %arg5: memref<16x48xf32, #tpu.memory_space<vmem>>, %arg6: memref<16x48xf32, #tpu.memory_space<vmem>>, %arg7: memref<1x16xf32, #tpu.memory_space<vmem>>, %arg8: memref<1x16xf32, #tpu.memory_space<vmem>>, %arg9: memref<8x2x32xf32, #tpu.memory_space<vmem>>, %arg10: memref<2x2x16xf32, #tpu.memory_space<vmem>>, %arg11: memref<8x2x96xf32, #tpu.memory_space<vmem>>) attributes {dimension_semantics = [#tpu.dimension_semantics<parallel>], iteration_bounds = array<i64: 1>, scalar_prefetch = 0 : i64, scratch_operands = 1 : i64, tpu.core_type = #tpu.core_type<tc>, window_params = [{transform_indices = @transform_0, window_bounds = array<i64: 8, 2, 16>}, {transform_indices = @transform_1, window_bounds = array<i64: 2, 1>}, {pipeline_mode = #tpu.pipeline_mode<synchronous>, transform_indices = @transform_2, window_bounds = array<i64: 16, 96>}, {pipeline_mode = #tpu.pipeline_mode<synchronous>, transform_indices = @transform_3, window_bounds = array<i64: 1, 96>}, {pipeline_mode = #tpu.pipeline_mode<synchronous>, transform_indices = @transform_4, window_bounds = array<i64: 16, 48>}, {pipeline_mode = #tpu.pipeline_mode<synchronous>, transform_indices = @transform_5, window_bounds = array<i64: 16, 48>}, {pipeline_mode = #tpu.pipeline_mode<synchronous>, transform_indices = @transform_6, window_bounds = array<i64: 1, 16>}, {pipeline_mode = #tpu.pipeline_mode<synchronous>, transform_indices = @transform_7, window_bounds = array<i64: 1, 16>}, {transform_indices = @transform_8, window_bounds = array<i64: 8, 2, 32>}, {transform_indices = @transform_9, window_bounds = array<i64: 2, 2, 16>}]} {
    %c0 = arith.constant 0 : index
    %c0_0 = arith.constant 0 : index
    %c0_1 = arith.constant 0 : index
    %0 = vector.load %arg1[%c0, %c0_0, %c0_1] : memref<8x2x16xf32, #tpu.memory_space<vmem>>, vector<8x2x16xf32>
    %1 = vector.shape_cast %0 : vector<8x2x16xf32> to vector<16x16xf32>
    %2 = arith.truncf %1 : vector<16x16xf32> to vector<16x16xbf16>
    %c0_2 = arith.constant 0 : index
    %c0_3 = arith.constant 0 : index
    %3 = vector.load %arg3[%c0_2, %c0_3] : memref<16x96xbf16, #tpu.memory_space<vmem>>, vector<16x96xbf16>
    %cst = arith.constant dense<0.000000e+00> : vector<16x96xf32>
    %4 = tpu.matmul %2, %3, %cst {dimension_numbers = #tpu.dot_dimension_numbers<[1], [0], [0], [1], [0, 0, 1, 1], [], []>} : vector<16x16xbf16>, vector<16x96xbf16>, vector<16x96xf32> -> vector<16x96xf32>
    %c0_4 = arith.constant 0 : index
    %c0_5 = arith.constant 0 : index
    %5 = vector.load %arg4[%c0_4, %c0_5] : memref<1x96xf32, #tpu.memory_space<vmem>>, vector<1x96xf32>
    %6 = vector.broadcast %5 : vector<1x96xf32> to vector<16x96xf32>
    %7 = arith.addf %4, %6 : vector<16x96xf32>
    %8 = vector.shape_cast %7 : vector<16x96xf32> to vector<8x2x96xf32>
    %c0_6 = arith.constant 0 : index
    %c0_7 = arith.constant 0 : index
    %c0_8 = arith.constant 0 : index
    %9 = vector.load %arg11[%c0_6, %c0_7, %c0_8] : memref<8x2x96xf32, #tpu.memory_space<vmem>>, vector<8x2x96xf32>
    tpu.vector_store %arg11[%c0_6, %c0_7, %c0_8], %8 {strides = array<i32>} : memref<8x2x96xf32, #tpu.memory_space<vmem>>, vector<8x2x96xf32>,
    %c0_9 = arith.constant 0 : index
    %c0_10 = arith.constant 0 : index
    %10 = vector.load %arg2[%c0_9, %c0_10] : memref<2x1xi32, #tpu.memory_space<vmem>>, vector<2x1xi32>
    %c0_11 = arith.constant 0 : index
    %c0_12 = arith.constant 0 : index
    %11 = vector.load %arg5[%c0_11, %c0_12] : memref<16x48xf32, #tpu.memory_space<vmem>>, vector<16x48xf32>
    %c0_13 = arith.constant 0 : index
    %c0_14 = arith.constant 0 : index
    %12 = vector.load %arg6[%c0_13, %c0_14] : memref<16x48xf32, #tpu.memory_space<vmem>>, vector<16x48xf32>
    %c0_15 = arith.constant 0 : index
    %c0_16 = arith.constant 0 : index
    %13 = vector.load %arg7[%c0_15, %c0_16] : memref<1x16xf32, #tpu.memory_space<vmem>>, vector<1x16xf32>
    %14 = vector.shape_cast %13 : vector<1x16xf32> to vector<1x16xf32>
    %15 = vector.broadcast %14 : vector<1x16xf32> to vector<2x16xf32>
    %c0_17 = arith.constant 0 : index
    %c0_18 = arith.constant 0 : index
    %16 = vector.load %arg8[%c0_17, %c0_18] : memref<1x16xf32, #tpu.memory_space<vmem>>, vector<1x16xf32>
    %17 = vector.shape_cast %16 : vector<1x16xf32> to vector<1x16xf32>
    %18 = vector.broadcast %17 : vector<1x16xf32> to vector<2x16xf32>
    %cst_19 = arith.constant 0.000000e+00 : f32
    %19 = vector.broadcast %cst_19 : f32 to vector<2x16xf32>
    %c0_i32 = arith.constant 0 : i32
    %c8_i32 = arith.constant 8 : i32
    %20 = arith.addi %c0_i32, %c8_i32 : i32
    %c1_i32 = arith.constant 1 : i32
    %21:2 = scf.for %arg12 = %c0_i32 to %20 step %c1_i32 iter_args(%arg13 = %19, %arg14 = %19) -> (vector<2x16xf32>, vector<2x16xf32>)  : i32 {
      %c7_i32 = arith.constant 7 : i32
      %28 = arith.subi %c7_i32, %arg12 : i32
      %29 = arith.index_cast %arg12 : i32 to index
      %c0_26 = arith.constant 0 : index
      %c0_27 = arith.constant 0 : index
      %30 = vector.load %arg11[%29, %c0_26, %c0_27] : memref<8x2x96xf32, #tpu.memory_space<vmem>>, vector<1x2x48xf32>
      %31 = vector.shape_cast %30 : vector<1x2x48xf32> to vector<2x48xf32>
      %32 = arith.index_cast %28 : i32 to index
      %c0_28 = arith.constant 0 : index
      %c48 = arith.constant 48 : index
      %33 = vector.load %arg11[%32, %c0_28, %c48] : memref<8x2x96xf32, #tpu.memory_space<vmem>>, vector<1x2x48xf32>
      %34 = vector.shape_cast %33 : vector<1x2x48xf32> to vector<2x48xf32>
      %cst_29 = arith.constant dense<0.000000e+00> : vector<2x48xf32>
      %35 = tpu.matmul %arg13, %11, %cst_29 {dimension_numbers = #tpu.dot_dimension_numbers<[1], [0], [0], [1], [0, 0, 1, 1], [], []>} : vector<2x16xf32>, vector<16x48xf32>, vector<2x48xf32> -> vector<2x48xf32>
      %cst_30 = arith.constant dense<0.000000e+00> : vector<2x48xf32>
      %36 = tpu.matmul %arg14, %12, %cst_30 {dimension_numbers = #tpu.dot_dimension_numbers<[1], [0], [0], [1], [0, 0, 1, 1], [], []>} : vector<2x16xf32>, vector<16x48xf32>, vector<2x48xf32> -> vector<2x48xf32>
      %37 = vector.extract_strided_slice %31 {offsets = [0, 0], sizes = [2, 16], strides = [1, 1]} : vector<2x48xf32> to vector<2x16xf32>
      %38 = vector.extract_strided_slice %35 {offsets = [0, 0], sizes = [2, 16], strides = [1, 1]} : vector<2x48xf32> to vector<2x16xf32>
      %39 = arith.addf %37, %38 : vector<2x16xf32>
      %40 = arith.negf %39 : vector<2x16xf32>
      %41 = math.exp %40 : vector<2x16xf32>
      %cst_31 = arith.constant 1.000000e+00 : f32
      %42 = vector.broadcast %cst_31 : f32 to vector<2x16xf32>
      %43 = arith.addf %42, %41 : vector<2x16xf32>
      %44 = arith.divf %42, %43 : vector<2x16xf32>
      %45 = vector.extract_strided_slice %31 {offsets = [0, 16], sizes = [2, 16], strides = [1, 1]} : vector<2x48xf32> to vector<2x16xf32>
      %46 = vector.extract_strided_slice %35 {offsets = [0, 16], sizes = [2, 16], strides = [1, 1]} : vector<2x48xf32> to vector<2x16xf32>
      %47 = arith.addf %45, %46 : vector<2x16xf32>
      %48 = arith.negf %47 : vector<2x16xf32>
      %49 = math.exp %48 : vector<2x16xf32>
      %cst_32 = arith.constant 1.000000e+00 : f32
      %50 = vector.broadcast %cst_32 : f32 to vector<2x16xf32>
      %51 = arith.addf %50, %49 : vector<2x16xf32>
      %52 = arith.divf %50, %51 : vector<2x16xf32>
      %53 = vector.extract_strided_slice %31 {offsets = [0, 32], sizes = [2, 16], strides = [1, 1]} : vector<2x48xf32> to vector<2x16xf32>
      %54 = vector.extract_strided_slice %35 {offsets = [0, 32], sizes = [2, 16], strides = [1, 1]} : vector<2x48xf32> to vector<2x16xf32>
      %55 = arith.addf %54, %15 : vector<2x16xf32>
      %56 = arith.mulf %44, %55 : vector<2x16xf32>
      %57 = arith.addf %53, %56 : vector<2x16xf32>
      %58 = math.tanh %57 : vector<2x16xf32>
      %cst_33 = arith.constant 1.000000e+00 : f32
      %59 = vector.broadcast %cst_33 : f32 to vector<2x16xf32>
      %60 = arith.subf %59, %52 : vector<2x16xf32>
      %61 = arith.mulf %60, %58 : vector<2x16xf32>
      %62 = arith.mulf %52, %arg13 : vector<2x16xf32>
      %63 = arith.addf %61, %62 : vector<2x16xf32>
      %64 = vector.extract_strided_slice %34 {offsets = [0, 0], sizes = [2, 16], strides = [1, 1]} : vector<2x48xf32> to vector<2x16xf32>
      %65 = vector.extract_strided_slice %36 {offsets = [0, 0], sizes = [2, 16], strides = [1, 1]} : vector<2x48xf32> to vector<2x16xf32>
      %66 = arith.addf %64, %65 : vector<2x16xf32>
      %67 = arith.negf %66 : vector<2x16xf32>
      %68 = math.exp %67 : vector<2x16xf32>
      %cst_34 = arith.constant 1.000000e+00 : f32
      %69 = vector.broadcast %cst_34 : f32 to vector<2x16xf32>
      %70 = arith.addf %69, %68 : vector<2x16xf32>
      %71 = arith.divf %69, %70 : vector<2x16xf32>
      %72 = vector.extract_strided_slice %34 {offsets = [0, 16], sizes = [2, 16], strides = [1, 1]} : vector<2x48xf32> to vector<2x16xf32>
      %73 = vector.extract_strided_slice %36 {offsets = [0, 16], sizes = [2, 16], strides = [1, 1]} : vector<2x48xf32> to vector<2x16xf32>
      %74 = arith.addf %72, %73 : vector<2x16xf32>
      %75 = arith.negf %74 : vector<2x16xf32>
      %76 = math.exp %75 : vector<2x16xf32>
      %cst_35 = arith.constant 1.000000e+00 : f32
      %77 = vector.broadcast %cst_35 : f32 to vector<2x16xf32>
      %78 = arith.addf %77, %76 : vector<2x16xf32>
      %79 = arith.divf %77, %78 : vector<2x16xf32>
      %80 = vector.extract_strided_slice %34 {offsets = [0, 32], sizes = [2, 16], strides = [1, 1]} : vector<2x48xf32> to vector<2x16xf32>
      %81 = vector.extract_strided_slice %36 {offsets = [0, 32], sizes = [2, 16], strides = [1, 1]} : vector<2x48xf32> to vector<2x16xf32>
      %82 = arith.addf %81, %18 : vector<2x16xf32>
      %83 = arith.mulf %71, %82 : vector<2x16xf32>
      %84 = arith.addf %80, %83 : vector<2x16xf32>
      %85 = math.tanh %84 : vector<2x16xf32>
      %cst_36 = arith.constant 1.000000e+00 : f32
      %86 = vector.broadcast %cst_36 : f32 to vector<2x16xf32>
      %87 = arith.subf %86, %79 : vector<2x16xf32>
      %88 = arith.mulf %87, %85 : vector<2x16xf32>
      %89 = arith.mulf %79, %arg14 : vector<2x16xf32>
      %90 = arith.addf %88, %89 : vector<2x16xf32>
      %91 = vector.broadcast %arg12 : i32 to vector<2x1xi32>
      %92 = arith.cmpi slt, %91, %10 : vector<2x1xi32>
      %93 = vector.broadcast %28 : i32 to vector<2x1xi32>
      %94 = arith.cmpi slt, %93, %10 : vector<2x1xi32>
      %95 = vector.shape_cast %92 : vector<2x1xi1> to vector<2x1xi1>
      %96 = vector.broadcast %95 : vector<2x1xi1> to vector<2x16xi1>
      %97 = arith.select %96, %63, %arg13 : vector<2x16xi1>, vector<2x16xf32>
      %98 = vector.shape_cast %94 : vector<2x1xi1> to vector<2x1xi1>
      %99 = vector.broadcast %98 : vector<2x1xi1> to vector<2x16xi1>
      %100 = arith.select %99, %90, %arg14 : vector<2x16xi1>, vector<2x16xf32>
      %cst_37 = arith.constant 0.000000e+00 : f32
      %101 = vector.shape_cast %92 : vector<2x1xi1> to vector<2x1xi1>
      %102 = vector.broadcast %101 : vector<2x1xi1> to vector<2x16xi1>
      %103 = vector.broadcast %cst_37 : f32 to vector<2x16xf32>
      %104 = arith.select %102, %63, %103 : vector<2x16xi1>, vector<2x16xf32>
      %105 = arith.index_cast %arg12 : i32 to index
      %c0_38 = arith.constant 0 : index
      %c0_39 = arith.constant 0 : index
      %106 = vector.load %arg9[%105, %c0_38, %c0_39] : memref<8x2x32xf32, #tpu.memory_space<vmem>>, vector<1x2x16xf32>
      %107 = vector.shape_cast %106 : vector<1x2x16xf32> to vector<2x16xf32>
      %108 = vector.shape_cast %104 : vector<2x16xf32> to vector<1x2x16xf32>
      tpu.vector_store %arg9[%105, %c0_38, %c0_39], %108 {strides = array<i32>} : memref<8x2x32xf32, #tpu.memory_space<vmem>>, vector<1x2x16xf32>,
      %cst_40 = arith.constant 0.000000e+00 : f32
      %109 = vector.shape_cast %94 : vector<2x1xi1> to vector<2x1xi1>
      %110 = vector.broadcast %109 : vector<2x1xi1> to vector<2x16xi1>
      %111 = vector.broadcast %cst_40 : f32 to vector<2x16xf32>
      %112 = arith.select %110, %90, %111 : vector<2x16xi1>, vector<2x16xf32>
      %113 = arith.index_cast %28 : i32 to index
      %c0_41 = arith.constant 0 : index
      %c16 = arith.constant 16 : index
      %114 = vector.load %arg9[%113, %c0_41, %c16] : memref<8x2x32xf32, #tpu.memory_space<vmem>>, vector<1x2x16xf32>
      %115 = vector.shape_cast %114 : vector<1x2x16xf32> to vector<2x16xf32>
      %116 = vector.shape_cast %112 : vector<2x16xf32> to vector<1x2x16xf32>
      tpu.vector_store %arg9[%113, %c0_41, %c16], %116 {strides = array<i32>} : memref<8x2x32xf32, #tpu.memory_space<vmem>>, vector<1x2x16xf32>,
      scf.yield %97, %100 : vector<2x16xf32>, vector<2x16xf32>
    }
    %c8_i32_20 = arith.constant 8 : i32
    %c0_21 = arith.constant 0 : index
    %c0_22 = arith.constant 0 : index
    %c0_23 = arith.constant 0 : index
    %22 = vector.load %arg10[%c0_21, %c0_22, %c0_23] : memref<2x2x16xf32, #tpu.memory_space<vmem>>, vector<1x2x16xf32>
    %23 = vector.shape_cast %22 : vector<1x2x16xf32> to vector<2x16xf32>
    %24 = vector.shape_cast %21#0 : vector<2x16xf32> to vector<1x2x16xf32>
    tpu.vector_store %arg10[%c0_21, %c0_22, %c0_23], %24 {strides = array<i32>} : memref<2x2x16xf32, #tpu.memory_space<vmem>>, vector<1x2x16xf32>,
    %c1 = arith.constant 1 : index
    %c0_24 = arith.constant 0 : index
    %c0_25 = arith.constant 0 : index
    %25 = vector.load %arg10[%c1, %c0_24, %c0_25] : memref<2x2x16xf32, #tpu.memory_space<vmem>>, vector<1x2x16xf32>
    %26 = vector.shape_cast %25 : vector<1x2x16xf32> to vector<2x16xf32>
    %27 = vector.shape_cast %21#1 : vector<2x16xf32> to vector<1x2x16xf32>
    tpu.vector_store %arg10[%c1, %c0_24, %c0_25], %27 {strides = array<i32>} : memref<2x2x16xf32, #tpu.memory_space<vmem>>, vector<1x2x16xf32>,
    return
  }
  func.func @transform_0(%arg0: i32) -> (i32, i32, i32) {
    %c0_i32 = arith.constant 0 : i32
    %c0_i32_0 = arith.constant 0 : i32
    %c0_i32_1 = arith.constant 0 : i32
    return %c0_i32, %arg0, %c0_i32_0 : i32, i32, i32
  }
  func.func @transform_1(%arg0: i32) -> (i32, i32) {
    %c0_i32 = arith.constant 0 : i32
    %c0_i32_0 = arith.constant 0 : i32
    return %arg0, %c0_i32 : i32, i32
  }
  func.func @transform_2(%arg0: i32) -> (i32, i32) {
    %c0_i32 = arith.constant 0 : i32
    %c0_i32_0 = arith.constant 0 : i32
    %c0_i32_1 = arith.constant 0 : i32
    return %c0_i32, %c0_i32_0 : i32, i32
  }
  func.func @transform_3(%arg0: i32) -> (i32, i32) {
    %c0_i32 = arith.constant 0 : i32
    %c0_i32_0 = arith.constant 0 : i32
    %c0_i32_1 = arith.constant 0 : i32
    return %c0_i32, %c0_i32_0 : i32, i32
  }
  func.func @transform_4(%arg0: i32) -> (i32, i32) {
    %c0_i32 = arith.constant 0 : i32
    %c0_i32_0 = arith.constant 0 : i32
    %c0_i32_1 = arith.constant 0 : i32
    return %c0_i32, %c0_i32_0 : i32, i32
  }
  func.func @transform_5(%arg0: i32) -> (i32, i32) {
    %c0_i32 = arith.constant 0 : i32
    %c0_i32_0 = arith.constant 0 : i32
    %c0_i32_1 = arith.constant 0 : i32
    return %c0_i32, %c0_i32_0 : i32, i32
  }
  func.func @transform_6(%arg0: i32) -> (i32, i32) {
    %c0_i32 = arith.constant 0 : i32
    %c0_i32_0 = arith.constant 0 : i32
    %c0_i32_1 = arith.constant 0 : i32
    return %c0_i32, %c0_i32_0 : i32, i32
  }
  func.func @transform_7(%arg0: i32) -> (i32, i32) {
    %c0_i32 = arith.constant 0 : i32
    %c0_i32_0 = arith.constant 0 : i32
    %c0_i32_1 = arith.constant 0 : i32
    return %c0_i32, %c0_i32_0 : i32, i32
  }
  func.func @transform_8(%arg0: i32) -> (i32, i32, i32) {
    %c0_i32 = arith.constant 0 : i32
    %c0_i32_0 = arith.constant 0 : i32
    %c0_i32_1 = arith.constant 0 : i32
    return %c0_i32, %arg0, %c0_i32_0 : i32, i32, i32
  }
  func.func @transform_9(%arg0: i32) -> (i32, i32, i32) {
    %c0_i32 = arith.constant 0 : i32
    %c0_i32_0 = arith.constant 0 : i32
    %c0_i32_1 = arith.constant 0 : i32
    return %c0_i32, %arg0, %c0_i32_0 : i32, i32, i32
  }
}

module attributes {stable_mosaic.version = 11 : i64} {
  func.func @_gate_kernel(%arg0: i32, %arg1: memref<8x2x32xf32, #tpu.memory_space<vmem>>, %arg2: memref<8x16xf32, #tpu.memory_space<vmem>>, %arg3: memref<2x16xf32, #tpu.memory_space<vmem>>, %arg4: memref<16x32xbf16, #tpu.memory_space<vmem>>, %arg5: memref<16x32xbf16, #tpu.memory_space<vmem>>, %arg6: memref<32x32xbf16, #tpu.memory_space<vmem>>, %arg7: memref<1x32xf32, #tpu.memory_space<vmem>>, %arg8: memref<8x2x32xf32, #tpu.memory_space<vmem>>) attributes {dimension_semantics = [#tpu.dimension_semantics<parallel>], iteration_bounds = array<i64: 1>, scalar_prefetch = 0 : i64, scratch_operands = 0 : i64, tpu.core_type = #tpu.core_type<tc>, window_params = [{transform_indices = @transform_0, window_bounds = array<i64: 8, 2, 32>}, {transform_indices = @transform_1, window_bounds = array<i64: 8, 16>}, {pipeline_mode = #tpu.pipeline_mode<synchronous>, transform_indices = @transform_2, window_bounds = array<i64: 2, 16>}, {pipeline_mode = #tpu.pipeline_mode<synchronous>, transform_indices = @transform_3, window_bounds = array<i64: 16, 32>}, {pipeline_mode = #tpu.pipeline_mode<synchronous>, transform_indices = @transform_4, window_bounds = array<i64: 16, 32>}, {pipeline_mode = #tpu.pipeline_mode<synchronous>, transform_indices = @transform_5, window_bounds = array<i64: 32, 32>}, {pipeline_mode = #tpu.pipeline_mode<synchronous>, transform_indices = @transform_6, window_bounds = array<i64: 1, 32>}, {transform_indices = @transform_7, window_bounds = array<i64: 8, 2, 32>}]} {
    %c0 = arith.constant 0 : index
    %c0_0 = arith.constant 0 : index
    %c0_1 = arith.constant 0 : index
    %0 = vector.load %arg1[%c0, %c0_0, %c0_1] : memref<8x2x32xf32, #tpu.memory_space<vmem>>, vector<8x2x32xf32>
    %c0_2 = arith.constant 0 : index
    %c0_3 = arith.constant 0 : index
    %1 = vector.load %arg2[%c0_2, %c0_3] : memref<8x16xf32, #tpu.memory_space<vmem>>, vector<8x16xf32>
    %2 = arith.truncf %1 : vector<8x16xf32> to vector<8x16xbf16>
    %c0_4 = arith.constant 0 : index
    %c0_5 = arith.constant 0 : index
    %3 = vector.load %arg4[%c0_4, %c0_5] : memref<16x32xbf16, #tpu.memory_space<vmem>>, vector<16x32xbf16>
    %cst = arith.constant dense<0.000000e+00> : vector<8x32xf32>
    %4 = tpu.matmul %2, %3, %cst {dimension_numbers = #tpu.dot_dimension_numbers<[1], [0], [0], [1], [0, 0, 1, 1], [], []>} : vector<8x16xbf16>, vector<16x32xbf16>, vector<8x32xf32> -> vector<8x32xf32>
    %c0_6 = arith.constant 0 : index
    %c0_7 = arith.constant 0 : index
    %5 = vector.load %arg3[%c0_6, %c0_7] : memref<2x16xf32, #tpu.memory_space<vmem>>, vector<2x16xf32>
    %6 = arith.truncf %5 : vector<2x16xf32> to vector<2x16xbf16>
    %c0_8 = arith.constant 0 : index
    %c0_9 = arith.constant 0 : index
    %7 = vector.load %arg5[%c0_8, %c0_9] : memref<16x32xbf16, #tpu.memory_space<vmem>>, vector<16x32xbf16>
    %cst_10 = arith.constant dense<0.000000e+00> : vector<2x32xf32>
    %8 = tpu.matmul %6, %7, %cst_10 {dimension_numbers = #tpu.dot_dimension_numbers<[1], [0], [0], [1], [0, 0, 1, 1], [], []>} : vector<2x16xbf16>, vector<16x32xbf16>, vector<2x32xf32> -> vector<2x32xf32>
    %9 = vector.shape_cast %0 : vector<8x2x32xf32> to vector<16x32xf32>
    %10 = arith.truncf %9 : vector<16x32xf32> to vector<16x32xbf16>
    %c0_11 = arith.constant 0 : index
    %c0_12 = arith.constant 0 : index
    %11 = vector.load %arg6[%c0_11, %c0_12] : memref<32x32xbf16, #tpu.memory_space<vmem>>, vector<32x32xbf16>
    %cst_13 = arith.constant dense<0.000000e+00> : vector<16x32xf32>
    %12 = tpu.matmul %10, %11, %cst_13 {dimension_numbers = #tpu.dot_dimension_numbers<[1], [0], [0], [1], [0, 0, 1, 1], [], []>} : vector<16x32xbf16>, vector<32x32xbf16>, vector<16x32xf32> -> vector<16x32xf32>
    %13 = vector.shape_cast %12 : vector<16x32xf32> to vector<8x2x32xf32>
    %14 = vector.shape_cast %4 : vector<8x32xf32> to vector<8x1x32xf32>
    %15 = vector.broadcast %14 : vector<8x1x32xf32> to vector<8x2x32xf32>
    %16 = arith.addf %13, %15 : vector<8x2x32xf32>
    %17 = vector.shape_cast %8 : vector<2x32xf32> to vector<1x2x32xf32>
    %18 = vector.broadcast %17 : vector<1x2x32xf32> to vector<8x2x32xf32>
    %19 = arith.addf %16, %18 : vector<8x2x32xf32>
    %c0_14 = arith.constant 0 : index
    %c0_15 = arith.constant 0 : index
    %20 = vector.load %arg7[%c0_14, %c0_15] : memref<1x32xf32, #tpu.memory_space<vmem>>, vector<1x32xf32>
    %21 = vector.shape_cast %20 : vector<1x32xf32> to vector<1x1x32xf32>
    %22 = vector.broadcast %21 : vector<1x1x32xf32> to vector<8x2x32xf32>
    %23 = arith.addf %19, %22 : vector<8x2x32xf32>
    %24 = arith.negf %23 : vector<8x2x32xf32>
    %25 = math.exp %24 : vector<8x2x32xf32>
    %cst_16 = arith.constant 1.000000e+00 : f32
    %26 = vector.broadcast %cst_16 : f32 to vector<8x2x32xf32>
    %27 = arith.addf %26, %25 : vector<8x2x32xf32>
    %28 = arith.divf %26, %27 : vector<8x2x32xf32>
    %29 = arith.mulf %0, %28 : vector<8x2x32xf32>
    %c0_17 = arith.constant 0 : index
    %c0_18 = arith.constant 0 : index
    %c0_19 = arith.constant 0 : index
    %30 = vector.load %arg8[%c0_17, %c0_18, %c0_19] : memref<8x2x32xf32, #tpu.memory_space<vmem>>, vector<8x2x32xf32>
    tpu.vector_store %arg8[%c0_17, %c0_18, %c0_19], %29 {strides = array<i32>} : memref<8x2x32xf32, #tpu.memory_space<vmem>>, vector<8x2x32xf32>,
    return
  }
  func.func @transform_0(%arg0: i32) -> (i32, i32, i32) {
    %c0_i32 = arith.constant 0 : i32
    %c0_i32_0 = arith.constant 0 : i32
    %c0_i32_1 = arith.constant 0 : i32
    return %arg0, %c0_i32, %c0_i32_0 : i32, i32, i32
  }
  func.func @transform_1(%arg0: i32) -> (i32, i32) {
    %c0_i32 = arith.constant 0 : i32
    %c0_i32_0 = arith.constant 0 : i32
    return %arg0, %c0_i32 : i32, i32
  }
  func.func @transform_2(%arg0: i32) -> (i32, i32) {
    %c0_i32 = arith.constant 0 : i32
    %c0_i32_0 = arith.constant 0 : i32
    %c0_i32_1 = arith.constant 0 : i32
    return %c0_i32, %c0_i32_0 : i32, i32
  }
  func.func @transform_3(%arg0: i32) -> (i32, i32) {
    %c0_i32 = arith.constant 0 : i32
    %c0_i32_0 = arith.constant 0 : i32
    %c0_i32_1 = arith.constant 0 : i32
    return %c0_i32, %c0_i32_0 : i32, i32
  }
  func.func @transform_4(%arg0: i32) -> (i32, i32) {
    %c0_i32 = arith.constant 0 : i32
    %c0_i32_0 = arith.constant 0 : i32
    %c0_i32_1 = arith.constant 0 : i32
    return %c0_i32, %c0_i32_0 : i32, i32
  }
  func.func @transform_5(%arg0: i32) -> (i32, i32) {
    %c0_i32 = arith.constant 0 : i32
    %c0_i32_0 = arith.constant 0 : i32
    %c0_i32_1 = arith.constant 0 : i32
    return %c0_i32, %c0_i32_0 : i32, i32
  }
  func.func @transform_6(%arg0: i32) -> (i32, i32) {
    %c0_i32 = arith.constant 0 : i32
    %c0_i32_0 = arith.constant 0 : i32
    %c0_i32_1 = arith.constant 0 : i32
    return %c0_i32, %c0_i32_0 : i32, i32
  }
  func.func @transform_7(%arg0: i32) -> (i32, i32, i32) {
    %c0_i32 = arith.constant 0 : i32
    %c0_i32_0 = arith.constant 0 : i32
    %c0_i32_1 = arith.constant 0 : i32
    return %arg0, %c0_i32, %c0_i32_0 : i32, i32, i32
  }
}

</mosaic_0001>

<llo_original>
// kernel: pos_gated_encoder_forward.4
$region0: #{pos_gated_encoder_forward.4}
  #allocation0 [shape = 'u32[]', space=smem, size = 0x4, offset = 0x4, fixed_abs, tag = 'smem constant byte address 0x4 - core index']
  #allocation1 [shape = 'u32[144,128]{1,0:T(1,128)}', space=vmem, size = 0x12000, scoped, tag = 'internal scratch']
  #allocation2 [shape = 'f32[8,2,96]{2,1,0:T(2,128)}', space=vmem, size = 0x2000, scoped, tag = 'scratch operand']
  %s0 = inlined_call_operand.vmem [shape: f32[8,2,32], index: 0, kind: input, shape index: {}]
  %s1 = inlined_call_operand.vmem [shape: s32[2,1], index: 1, kind: input, shape index: {}]
  %s2 = inlined_call_operand.vmem [shape: bf16[32,96], index: 2, kind: input, shape index: {}]
  %s3 = inlined_call_operand.vmem [shape: f32[1,96], index: 3, kind: input, shape index: {}]
  %s4 = inlined_call_operand.vmem [shape: f32[16,48], index: 4, kind: input, shape index: {}]
  %s5 = inlined_call_operand.vmem [shape: f32[16,48], index: 5, kind: input, shape index: {}]
  %s6 = inlined_call_operand.vmem [shape: f32[1,16], index: 6, kind: input, shape index: {}]
  %s7 = inlined_call_operand.vmem [shape: f32[1,16], index: 7, kind: input, shape index: {}]
  %s8 = inlined_call_operand.vmem [shape: f32[8,2,32], index: 8, kind: output, shape index: {0}]
  %s9 = inlined_call_operand.vmem [shape: f32[2,2,16], index: 9, kind: output, shape index: {1}]
  %10 = xla_tuple %s8, %s9
  %s11 = sld [smem:[#allocation0]]
  $region57: #{pos_gated_encoder_forward.4} parent=0
    _
  %s13 = ssub.s32 1, %s11
  %s14 = scalar_select 0, %s13, %s11
  // Predicated region
  $region2: #{pos_gated_encoder_forward.4} parent=0 // pred_check
    _
  $region3: #{pos_gated_encoder_forward.4} parent=0 // pred_check_branch
    %16 = sbr.rel (0) target = $region5
  $region4: #{pos_gated_encoder_forward.4} parent=0 // pred_region
    _
  $region5: #{pos_gated_encoder_forward.4} parent=0 // pred_fallthru
    _
  // Predicated region
  $region6: #{pos_gated_encoder_forward.4} parent=0 // pred_check
    _
  $region7: #{pos_gated_encoder_forward.4} parent=0 // pred_check_branch
    %18 = sbr.rel (0) target = $region9
  $region8: #{pos_gated_encoder_forward.4} parent=0 // pred_region
    _
  $region9: #{pos_gated_encoder_forward.4} parent=0 // pred_fallthru
    _
  // Predicated region
  $region10: #{pos_gated_encoder_forward.4} parent=0 // pred_check
    _
  $region11: #{pos_gated_encoder_forward.4} parent=0 // pred_check_branch
    %20 = sbr.rel (0) target = $region13
  $region12: #{pos_gated_encoder_forward.4} parent=0 // pred_region
    _
  $region13: #{pos_gated_encoder_forward.4} parent=0 // pred_fallthru
    _
  // Predicated region
  $region14: #{pos_gated_encoder_forward.4} parent=0 // pred_check
    _
  $region15: #{pos_gated_encoder_forward.4} parent=0 // pred_check_branch
    %22 = sbr.rel (0) target = $region17
  $region16: #{pos_gated_encoder_forward.4} parent=0 // pred_region
    _
  $region17: #{pos_gated_encoder_forward.4} parent=0 // pred_fallthru
    _
  // Predicated region
  $region18: #{pos_gated_encoder_forward.4} parent=0 // pred_check
    _
  $region19: #{pos_gated_encoder_forward.4} parent=0 // pred_check_branch
    %24 = sbr.rel (0) target = $region21
  $region20: #{pos_gated_encoder_forward.4} parent=0 // pred_region
    _
  $region21: #{pos_gated_encoder_forward.4} parent=0 // pred_fallthru
    _
  // Predicated region
  $region22: #{pos_gated_encoder_forward.4} parent=0 // pred_check
    _
  $region23: #{pos_gated_encoder_forward.4} parent=0 // pred_check_branch
    %26 = sbr.rel (0) target = $region25
  $region24: #{pos_gated_encoder_forward.4} parent=0 // pred_region
    _
  $region25: #{pos_gated_encoder_forward.4} parent=0 // pred_fallthru
    _
  // Predicated region
  $region26: #{pos_gated_encoder_forward.4} parent=0 // pred_check
    _
  $region27: #{pos_gated_encoder_forward.4} parent=0 // pred_check_branch
    %28 = sbr.rel (0) target = $region29
  $region28: #{pos_gated_encoder_forward.4} parent=0 // pred_region
    _
  $region29: #{pos_gated_encoder_forward.4} parent=0 // pred_fallthru
    _
  // Predicated region
  $region30: #{pos_gated_encoder_forward.4} parent=0 // pred_check
    _
  $region31: #{pos_gated_encoder_forward.4} parent=0 // pred_check_branch
    %30 = sbr.rel (0) target = $region33
  $region32: #{pos_gated_encoder_forward.4} parent=0 // pred_region
    _
  $region33: #{pos_gated_encoder_forward.4} parent=0 // pred_fallthru
    _
  %v32 = vld [vmem:[%s0] sm:$0x3]
  %v33 = vld [vmem:[%s0 + $0x2] sm:$0x3]
  %v34 = vld [vmem:[%s0 + $0x4] sm:$0x3]
  %v35 = vld [vmem:[%s0 + $0x6] sm:$0x3]
  %v36 = vld [vmem:[%s0 + $0x8] sm:$0x3]
  %v37 = vld [vmem:[%s0 + $0xa] sm:$0x3]
  %v38 = vld [vmem:[%s0 + $0xc] sm:$0x3]
  %v39 = vld [vmem:[%s0 + $0xe] sm:$0x3]
  %v48 = vcombine.low %v32, %v33
  %v49 = vcombine.low %v34, %v35
  %v51 = vunpack.c.l.s4 1983009808
  %v52 = vunpack.c.0.s8 %v51
  %v53 = vlaneseq
  %v54 = vshrl.u32 %v53, 7
  %v55 = vsub.s32 %v52, %v54
  %v56 = vrot.slane %v48, %v55
  %v58 = vunpack.c.l.s4 1983009808
  %v59 = vunpack.c.0.s8 %v58
  %v60 = vlaneseq
  %v61 = vshrl.u32 %v60, 7
  %v62 = vsub.s32 %v59, %v61
  %v63 = vrot.slane %v49, %v62
  %v64 = vcombine.low %v56, %v63
  %v65 = vcombine.low %v36, %v37
  %v66 = vcombine.low %v38, %v39
  %v68 = vunpack.c.l.s4 1983009808
  %v69 = vunpack.c.0.s8 %v68
  %v70 = vlaneseq
  %v71 = vshrl.u32 %v70, 7
  %v72 = vsub.s32 %v69, %v71
  %v73 = vrot.slane %v65, %v72
  %v75 = vunpack.c.l.s4 1983009808
  %v76 = vunpack.c.0.s8 %v75
  %v77 = vlaneseq
  %v78 = vshrl.u32 %v77, 7
  %v79 = vsub.s32 %v76, %v78
  %v80 = vrot.slane %v66, %v79
  %v81 = vcombine.low %v73, %v80
  %v84 = vpack.c.bf16 %v81, %v64
  %v85 = vld [vmem:[%s2] sm:$0xf]
  %v86 = vld [vmem:[%s2 + $0x4] sm:$0xf]
  %v87 = vld [vmem:[%s2 + $0x8] sm:$0xf]
  %v88 = vld [vmem:[%s2 + $0xc] sm:$0xf]
  %v89 = vld [vmem:[%s3] sm:$0x1]
  %v91 = vlaneseq
  %v92 = vshrl.u32 %v91, 7
  %v93 = vsub.s32 0, %v92
  %v94 = vrot.slane %v89, %v93
  %v100 = vunpack.c.l.b16 %v85
  %v101 = vunpack.c.l.b16 %v86
  %v102 = vunpack.c.l.b16 %v87
  %v103 = vunpack.c.l.b16 %v88
  %v104 = vpack.c.b16 %v101, %v100
  %v105 = vpack.c.b16 %v103, %v102
  %vm108 = vcmask 261120
  %v110 = vsel %vm108, %v84, 0
  %112 = vmatprep.subr.bf16.mxu0 0
  %113 = vmatpush1.bf16.msra.mxu0 %v104
  %114 = vmatprep.subr.bf16.mxu0 0
  %115 = vmatpush1.bf16.msra.mxu0 %v105
  %116 = vmatprep.subr.bf16.mxu0 0
  %117 = vmatpush1.bf16.msra.mxu0 0
  %118 = vmatprep.subr.bf16.mxu0 0
  %119 = vmatpush1.bf16.msra.mxu0 0
  %120 = vmatprep.subr.bf16.mxu0 0
  %121 = vmatpush1.bf16.msra.mxu0 0
  %122 = vmatprep.subr.bf16.mxu0 0
  %123 = vmatpush1.bf16.msra.mxu0 0
  %124 = vmatprep.subr.bf16.mxu0 0
  %125 = vmatpush1.bf16.msra.mxu0 0
  %126 = vmatprep.subr.bf16.mxu0 0
  %127 = vmatpush1.bf16.msra.mxu0 0
  %128 = vmatprep.subr.bf16.mxu0 0
  %129 = vmatpush1.bf16.msra.mxu0 0
  %130 = vmatprep.subr.bf16.mxu0 0
  %131 = vmatpush1.bf16.msra.mxu0 0
  %132 = vmatprep.subr.bf16.mxu0 0
  %133 = vmatpush1.bf16.msra.mxu0 0
  %134 = vmatprep.subr.bf16.mxu0 0
  %135 = vmatpush1.bf16.msra.mxu0 0
  %136 = vmatprep.subr.bf16.mxu0 0
  %137 = vmatpush1.bf16.msra.mxu0 0
  %138 = vmatprep.subr.bf16.mxu0 0
  %139 = vmatpush1.bf16.msra.mxu0 0
  %140 = vmatprep.subr.bf16.mxu0 0
  %141 = vmatpush1.bf16.msra.mxu0 0
  %142 = vmatprep.subr.bf16.mxu0 0
  %143 = vmatpush1.bf16.msra.mxu0 0
  %144 = vmatprep.mubr.bf16.mxu0 0
  %145 = vmatmul.mubr.bf16.gmra.mrb[0].mxu0 %v110
  %v146 = vpop.f32.mrb[0].mxu0
  %v147 = vadd.f32 %v94, %v146
  %v148 = vpop.f32.mrb[0].mxu0
  %v149 = vpop.f32.mrb[0].mxu0
  %v150 = vadd.f32 %v94, %v149
  %v151 = vpop.f32.mrb[0].mxu0
  %152 = vdwg.mxu0
  %v155 = vcombine.high %v147, %v147
  %v157 = vunpack.c.l.s4 1983009808
  %v158 = vunpack.c.0.s8 %v157
  %v159 = vlaneseq
  %v160 = vshrl.u32 %v159, 7
  %v161 = vsub.s32 %v158, %v160
  %v162 = vrot.slane %v147, %v161
  %v164 = vunpack.c.l.s4 1983009808
  %v165 = vunpack.c.0.s8 %v164
  %v166 = vlaneseq
  %v167 = vshrl.u32 %v166, 7
  %v168 = vsub.s32 %v165, %v167
  %v169 = vrot.slane %v155, %v168
  %v170 = vcombine.high %v162, %v162
  %v171 = vcombine.high %v169, %v169
  %v172 = vcombine.high %v150, %v150
  %v174 = vunpack.c.l.s4 1983009808
  %v175 = vunpack.c.0.s8 %v174
  %v176 = vlaneseq
  %v177 = vshrl.u32 %v176, 7
  %v178 = vsub.s32 %v175, %v177
  %v179 = vrot.slane %v150, %v178
  %v181 = vunpack.c.l.s4 1983009808
  %v182 = vunpack.c.0.s8 %v181
  %v183 = vlaneseq
  %v184 = vshrl.u32 %v183, 7
  %v185 = vsub.s32 %v182, %v184
  %v186 = vrot.slane %v172, %v185
  %v187 = vcombine.high %v179, %v179
  %v188 = vcombine.high %v186, %v186
  %vm197 = vcmask 779264
  %198 = vst.msk [vmem:[#allocation2] sm:$0x3] %vm197, %v162
  %199 = vst.msk [vmem:[#allocation2 + $0x2] sm:$0x3] %vm197, %v170
  %200 = vst.msk [vmem:[#allocation2 + $0x4] sm:$0x3] %vm197, %v169
  %201 = vst.msk [vmem:[#allocation2 + $0x6] sm:$0x3] %vm197, %v171
  %202 = vst.msk [vmem:[#allocation2 + $0x8] sm:$0x3] %vm197, %v179
  %203 = vst.msk [vmem:[#allocation2 + $0xa] sm:$0x3] %vm197, %v187
  %204 = vst.msk [vmem:[#allocation2 + $0xc] sm:$0x3] %vm197, %v186
  %205 = vst.msk [vmem:[#allocation2 + $0xe] sm:$0x3] %vm197, %v188
  %v206 = vld [vmem:[%s1] sm:$0x3]
  %v207 = vld [vmem:[%s4] sm:$0xff]
  %v208 = vld [vmem:[%s4 + $0x8] sm:$0xff]
  %v209 = vld [vmem:[%s5] sm:$0xff]
  %v210 = vld [vmem:[%s5 + $0x8] sm:$0xff]
  %v211 = vld [vmem:[%s6] sm:$0x1]
  %v213 = vlaneseq
  %v214 = vshrl.u32 %v213, 7
  %v215 = vsub.s32 0, %v214
  %v216 = vrot.slane %v211, %v215
  %v217 = vld [vmem:[%s7] sm:$0x1]
  %v219 = vlaneseq
  %v220 = vshrl.u32 %v219, 7
  %v221 = vsub.s32 0, %v220
  %v222 = vrot.slane %v217, %v221
  loop: start=0, step=1, limit=8
  $region34: #{pos_gated_encoder_forward.4} parent=0 // loop_pre_header
    _
  $region35: #{pos_gated_encoder_forward.4} parent=0 // loop_header
    %s224 = sphi 0, %s228
    %p225 = scmp.ge.s32.totalorder %s224, 8
    %v229 = vphi 0.0, %v462
    %v230 = vphi 0.0, %v468
  $region36: #{pos_gated_encoder_forward.4} parent=0 // loop_header_branch
    %227 = sbr.rel (%p225) target = $region40
  $region37: #{pos_gated_encoder_forward.4} parent=0 // loop_body
    %s231 = ssub.s32 7, %s224
    %s232 = smul.u32 %s224, 2
    %s233 = scalar_lea.vmem [#allocation2], %s232
    %v234 = vld [vmem:[%s233] sm:$0x3]
    %s235 = smul.u32 %s231, 2
    %s236 = scalar_lea.vmem [#allocation2], %s235
    %v237 = vld [vmem:[%s236] sm:$0x3]
    %239 = vrot.lane.b32.xlu0 %v229, 112
    %v240 = vpop.permute.xlu0 %239
    %vm241 = vcmask 130048
    %v242 = vsel %vm241, %v240, 0
    %244 = vmatprep.subr.mxu0 0.0
    %245 = vmatpush1.msra.mxu0 %v207
    %246 = vmatprep.subr.mxu0 0.0
    %247 = vmatpush1.msra.mxu0 %v208
    %248 = vmatprep.subr.mxu0 0.0
    %249 = vmatpush1.msra.mxu0 0.0
    %250 = vmatprep.subr.mxu0 0.0
    %251 = vmatpush1.msra.mxu0 0.0
    %252 = vmatprep.subr.mxu0 0.0
    %253 = vmatpush1.msra.mxu0 0.0
    %254 = vmatprep.subr.mxu0 0.0
    %255 = vmatpush1.msra.mxu0 0.0
    %256 = vmatprep.subr.mxu0 0.0
    %257 = vmatpush1.msra.mxu0 0.0
    %258 = vmatprep.subr.mxu0 0.0
    %259 = vmatpush1.msra.mxu0 0.0
    %260 = vmatprep.subr.mxu0 0.0
    %261 = vmatpush1.msra.mxu0 0.0
    %262 = vmatprep.subr.mxu0 0.0
    %263 = vmatpush1.msra.mxu0 0.0
    %264 = vmatprep.subr.mxu0 0.0
    %265 = vmatpush1.msra.mxu0 0.0
    %266 = vmatprep.subr.mxu0 0.0
    %267 = vmatpush1.msra.mxu0 0.0
    %268 = vmatprep.subr.mxu0 0.0
    %269 = vmatpush1.msra.mxu0 0.0
    %270 = vmatprep.subr.mxu0 0.0
    %271 = vmatpush1.msra.mxu0 0.0
    %272 = vmatprep.subr.mxu0 0.0
    %273 = vmatpush1.msra.mxu0 0.0
    %274 = vmatprep.subr.mxu0 0.0
    %275 = vmatpush1.msra.mxu0 0.0
    %276 = vmatprep.subr.mxu0 0.0
    %277 = vmatpush1.msra.mxu0 0.0
    %278 = vmatprep.subr.mxu0 0.0
    %279 = vmatpush1.msra.mxu0 0.0
    %280 = vmatprep.subr.mxu0 0.0
    %281 = vmatpush1.msra.mxu0 0.0
    %282 = vmatprep.subr.mxu0 0.0
    %283 = vmatpush1.msra.mxu0 0.0
    %284 = vmatprep.subr.mxu0 0.0
    %285 = vmatpush1.msra.mxu0 0.0
    %286 = vmatprep.subr.mxu0 0.0
    %287 = vmatpush1.msra.mxu0 0.0
    %288 = vmatprep.subr.mxu0 0.0
    %289 = vmatpush1.msra.mxu0 0.0
    %290 = vmatprep.subr.mxu0 0.0
    %291 = vmatpush1.msra.mxu0 0.0
    %292 = vmatprep.subr.mxu0 0.0
    %293 = vmatpush1.msra.mxu0 0.0
    %294 = vmatprep.subr.mxu0 0.0
    %295 = vmatpush1.msra.mxu0 0.0
    %296 = vmatprep.subr.mxu0 0.0
    %297 = vmatpush1.msra.mxu0 0.0
    %298 = vmatprep.subr.mxu0 0.0
    %299 = vmatpush1.msra.mxu0 0.0
    %300 = vmatprep.subr.mxu0 0.0
    %301 = vmatpush1.msra.mxu0 0.0
    %302 = vmatprep.subr.mxu0 0.0
    %303 = vmatpush1.msra.mxu0 0.0
    %304 = vmatprep.subr.mxu0 0.0
    %305 = vmatpush1.msra.mxu0 0.0
    %306 = vmatprep.subr.mxu0 0.0
    %307 = vmatpush1.msra.mxu0 0.0
    %308 = vmatprep.mubr.f32.mxu0 0.0
    %309 = vmatmul.mubr.f32.gmra.mrb[0].mxu0 %v242
    %v310 = vpop.f32.mrb[0].mxu0
    %v311 = vadd.f32 0.0, %v310
    %v312 = vpop.f32.mrb[0].mxu0
    %313 = vdwg.mxu0
    %315 = vrot.lane.b32.xlu0 %v230, 64
    %v316 = vpop.permute.xlu0 %315
    %v317 = vsel %vm241, %v316, 0
    %319 = vmatprep.subr.mxu0 0.0
    %320 = vmatpush1.msra.mxu0 %v209
    %321 = vmatprep.subr.mxu0 0.0
    %322 = vmatpush1.msra.mxu0 %v210
    %323 = vmatprep.subr.mxu0 0.0
    %324 = vmatpush1.msra.mxu0 0.0
    %325 = vmatprep.subr.mxu0 0.0
    %326 = vmatpush1.msra.mxu0 0.0
    %327 = vmatprep.subr.mxu0 0.0
    %328 = vmatpush1.msra.mxu0 0.0
    %329 = vmatprep.subr.mxu0 0.0
    %330 = vmatpush1.msra.mxu0 0.0
    %331 = vmatprep.subr.mxu0 0.0
    %332 = vmatpush1.msra.mxu0 0.0
    %333 = vmatprep.subr.mxu0 0.0
    %334 = vmatpush1.msra.mxu0 0.0
    %335 = vmatprep.subr.mxu0 0.0
    %336 = vmatpush1.msra.mxu0 0.0
    %337 = vmatprep.subr.mxu0 0.0
    %338 = vmatpush1.msra.mxu0 0.0
    %339 = vmatprep.subr.mxu0 0.0
    %340 = vmatpush1.msra.mxu0 0.0
    %341 = vmatprep.subr.mxu0 0.0
    %342 = vmatpush1.msra.mxu0 0.0
    %343 = vmatprep.subr.mxu0 0.0
    %344 = vmatpush1.msra.mxu0 0.0
    %345 = vmatprep.subr.mxu0 0.0
    %346 = vmatpush1.msra.mxu0 0.0
    %347 = vmatprep.subr.mxu0 0.0
    %348 = vmatpush1.msra.mxu0 0.0
    %349 = vmatprep.subr.mxu0 0.0
    %350 = vmatpush1.msra.mxu0 0.0
    %351 = vmatprep.subr.mxu0 0.0
    %352 = vmatpush1.msra.mxu0 0.0
    %353 = vmatprep.subr.mxu0 0.0
    %354 = vmatpush1.msra.mxu0 0.0
    %355 = vmatprep.subr.mxu0 0.0
    %356 = vmatpush1.msra.mxu0 0.0
    %357 = vmatprep.subr.mxu0 0.0
    %358 = vmatpush1.msra.mxu0 0.0
    %359 = vmatprep.subr.mxu0 0.0
    %360 = vmatpush1.msra.mxu0 0.0
    %361 = vmatprep.subr.mxu0 0.0
    %362 = vmatpush1.msra.mxu0 0.0
    %363 = vmatprep.subr.mxu0 0.0
    %364 = vmatpush1.msra.mxu0 0.0
    %365 = vmatprep.subr.mxu0 0.0
    %366 = vmatpush1.msra.mxu0 0.0
    %367 = vmatprep.subr.mxu0 0.0
    %368 = vmatpush1.msra.mxu0 0.0
    %369 = vmatprep.subr.mxu0 0.0
    %370 = vmatpush1.msra.mxu0 0.0
    %371 = vmatprep.subr.mxu0 0.0
    %372 = vmatpush1.msra.mxu0 0.0
    %373 = vmatprep.subr.mxu0 0.0
    %374 = vmatpush1.msra.mxu0 0.0
    %375 = vmatprep.subr.mxu0 0.0
    %376 = vmatpush1.msra.mxu0 0.0
    %377 = vmatprep.subr.mxu0 0.0
    %378 = vmatpush1.msra.mxu0 0.0
    %379 = vmatprep.subr.mxu0 0.0
    %380 = vmatpush1.msra.mxu0 0.0
    %381 = vmatprep.subr.mxu0 0.0
    %382 = vmatpush1.msra.mxu0 0.0
    %383 = vmatprep.mubr.f32.mxu0 0.0
    %384 = vmatmul.mubr.f32.gmra.mrb[0].mxu0 %v317
    %v385 = vpop.f32.mrb[0].mxu0
    %v386 = vadd.f32 0.0, %v385
    %v387 = vpop.f32.mrb[0].mxu0
    %388 = vdwg.mxu0
    %v389 = vadd.f32 %v234, %v311
    %v390 = vxor.u32 %v389, 2147483648
    %v391 = vmul.f32 %v390, 1.442695
    %v392 = vpow.pop %v391
    %v393 = vadd.f32 %v392, 1.0
    %v394 = vrcp.pop %v393
    %v395 = vmul.f32 1.0, %v394
    %396 = vrot.lane.b32.xlu0 %v216, 32
    %v397 = vpop.permute.xlu0 %396
    %v399 = vadd.f32 %v311, %v397
    %401 = vrot.lane.b32.xlu0 %v399, 96
    %v402 = vpop.permute.xlu0 %401
    %v404 = vmul.f32 %v395, %v402
    %406 = vrot.lane.b32.xlu0 %v404, 32
    %v407 = vpop.permute.xlu0 %406
    %v409 = vadd.f32 %v234, %v407
    %v410 = vtanh.pop %v409
    %v411 = vsub.f32 1.0, %v395
    %413 = vrot.lane.b32.xlu0 %v410, 112
    %v414 = vpop.permute.xlu0 %413
    %v416 = vmul.f32 %v411, %v414
    %v417 = vmul.f32 %v395, %v229
    %v418 = vadd.f32 %v416, %v417
    %420 = vrot.lane.b32.xlu0 %v386, 48
    %v421 = vpop.permute.xlu0 %420
    %v423 = vadd.f32 %v237, %v421
    %v424 = vxor.u32 %v423, 2147483648
    %v425 = vmul.f32 %v424, 1.442695
    %v426 = vpow.pop %v425
    %v427 = vadd.f32 %v426, 1.0
    %v428 = vrcp.pop %v427
    %v429 = vmul.f32 1.0, %v428
    %430 = vrot.lane.b32.xlu0 %v222, 32
    %v431 = vpop.permute.xlu0 %430
    %v433 = vadd.f32 %v386, %v431
    %435 = vrot.lane.b32.xlu0 %v433, 16
    %v436 = vpop.permute.xlu0 %435
    %v438 = vmul.f32 %v429, %v436
    %440 = vrot.lane.b32.xlu0 %v438, 32
    %v441 = vpop.permute.xlu0 %440
    %v443 = vadd.f32 %v237, %v441
    %v444 = vtanh.pop %v443
    %v445 = vsub.f32 1.0, %v429
    %447 = vrot.lane.b32.xlu0 %v444, 112
    %v448 = vpop.permute.xlu0 %447
    %v450 = vmul.f32 %v445, %v448
    %v451 = vmul.f32 %v429, %v230
    %v452 = vadd.f32 %v450, %v451
    %v453 = vstv %s224
    %vm454 = vcmp.lt.s32.totalorder %v453, %v206
    %v455 = vstv %s231
    %vm456 = vcmp.lt.s32.totalorder %v455, %v206
    %v457 = vsel %vm454, 1, 0
    %458 = vset.pattern.permute.xlu0 0
    %459 = vperm.xlu0 %458, %v457
    %v460 = vpop.permute.xlu0 %459
    %vm461 = vcmp.eq.s32.totalorder %v460, 1
    %v462 = vsel %vm461, %v418, %v229
    %v463 = vsel %vm456, 1, 0
    %464 = vset.pattern.permute.xlu0 0
    %465 = vperm.xlu0 %464, %v463
    %v466 = vpop.permute.xlu0 %465
    %vm467 = vcmp.eq.s32.totalorder %v466, 1
    %v468 = vsel %vm467, %v452, %v230
    %v469 = vsel %vm461, %v418, 0.0
    %471 = vrot.lane.b32.xlu0 %v469, 112
    %v472 = vpop.permute.xlu0 %471
    %s474 = scalar_lea.vmem %s8, %s232
    %vm475 = vcmask 123904
    %476 = vst.msk [vmem:[%s474] sm:$0x3] %vm475, %v472
    %v477 = vsel %vm467, %v452, 0.0
    %479 = vrot.lane.b32.xlu0 %v477, 80
    %v480 = vpop.permute.xlu0 %479
    %s482 = scalar_lea.vmem %s8, %s235
    %vm483 = vcmask 255104
    %484 = vst.msk [vmem:[%s482] sm:$0x3] %vm483, %v480
  $region38: #{pos_gated_encoder_forward.4} parent=0 // loop_footer
    %s228 = sadd.s32 1, %s224
  $region39: #{pos_gated_encoder_forward.4} parent=0 // loop_footer_branch
    %223 = sbr.rel target = $region35
  $region40: #{pos_gated_encoder_forward.4} parent=0 // loop_exit
    _
  %486 = vrot.lane.b32.xlu0 %v229, 112
  %v487 = vpop.permute.xlu0 %486
  %vm489 = vcmask 123904
  %490 = vst.msk [vmem:[%s9] sm:$0x3] %vm489, %v487
  %492 = vrot.lane.b32.xlu0 %v230, 64
  %v493 = vpop.permute.xlu0 %492
  %s495 = scalar_lea.vmem %s9, 2
  %496 = vst.msk [vmem:[%s495] sm:$0x3] %vm489, %v493
  // Predicated region
  $region41: #{pos_gated_encoder_forward.4} parent=0 // pred_check
    _
  $region42: #{pos_gated_encoder_forward.4} parent=0 // pred_check_branch
    %498 = sbr.rel (0) target = $region44
  $region43: #{pos_gated_encoder_forward.4} parent=0 // pred_region
    _
  $region44: #{pos_gated_encoder_forward.4} parent=0 // pred_fallthru
    _
  // Predicated region
  $region45: #{pos_gated_encoder_forward.4} parent=0 // pred_check
    _
  $region46: #{pos_gated_encoder_forward.4} parent=0 // pred_check_branch
    %500 = sbr.rel (0) target = $region48
  $region47: #{pos_gated_encoder_forward.4} parent=0 // pred_region
    _
  $region48: #{pos_gated_encoder_forward.4} parent=0 // pred_fallthru
    _
  // Predicated region
  $region49: #{pos_gated_encoder_forward.4} parent=0 // pred_check
    _
  $region50: #{pos_gated_encoder_forward.4} parent=0 // pred_check_branch
    %502 = sbr.rel (0) target = $region52
  $region51: #{pos_gated_encoder_forward.4} parent=0 // pred_region
    _
  $region52: #{pos_gated_encoder_forward.4} parent=0 // pred_fallthru
    _
  // Predicated region
  $region53: #{pos_gated_encoder_forward.4} parent=0 // pred_check
    _
  $region54: #{pos_gated_encoder_forward.4} parent=0 // pred_check_branch
    %504 = sbr.rel (0) target = $region56
  $region55: #{pos_gated_encoder_forward.4} parent=0 // pred_region
    _
  $region56: #{pos_gated_encoder_forward.4} parent=0 // pred_fallthru
    _

// kernel: pos_gated_encoder_forward.5
$region0: #{pos_gated_encoder_forward.5}
  #allocation0 [shape = 'u32[]', space=smem, size = 0x4, offset = 0x4, fixed_abs, tag = 'smem constant byte address 0x4 - core index']
  #allocation1 [shape = 'u32[144,128]{1,0:T(1,128)}', space=vmem, size = 0x12000, scoped, tag = 'internal scratch']
  %s0 = inlined_call_operand.vmem [shape: f32[8,2,32], index: 0, kind: input, shape index: {}]
  %s1 = inlined_call_operand.vmem [shape: f32[8,16], index: 1, kind: input, shape index: {}]
  %s2 = inlined_call_operand.vmem [shape: f32[2,16], index: 2, kind: input, shape index: {}]
  %s3 = inlined_call_operand.vmem [shape: bf16[16,32], index: 3, kind: input, shape index: {}]
  %s4 = inlined_call_operand.vmem [shape: bf16[16,32], index: 4, kind: input, shape index: {}]
  %s5 = inlined_call_operand.vmem [shape: bf16[32,32], index: 5, kind: input, shape index: {}]
  %s6 = inlined_call_operand.vmem [shape: f32[1,32], index: 6, kind: input, shape index: {}]
  %s7 = inlined_call_operand.vmem [shape: f32[8,2,32], index: 7, kind: output, shape index: {}]
  %s8 = sld [smem:[#allocation0]]
  $region38: #{pos_gated_encoder_forward.5} parent=0
    _
  %s10 = ssub.s32 1, %s8
  %s11 = scalar_select 0, %s10, %s8
  // Predicated region
  $region2: #{pos_gated_encoder_forward.5} parent=0 // pred_check
    _
  $region3: #{pos_gated_encoder_forward.5} parent=0 // pred_check_branch
    %13 = sbr.rel (0) target = $region5
  $region4: #{pos_gated_encoder_forward.5} parent=0 // pred_region
    _
  $region5: #{pos_gated_encoder_forward.5} parent=0 // pred_fallthru
    _
  // Predicated region
  $region6: #{pos_gated_encoder_forward.5} parent=0 // pred_check
    _
  $region7: #{pos_gated_encoder_forward.5} parent=0 // pred_check_branch
    %15 = sbr.rel (0) target = $region9
  $region8: #{pos_gated_encoder_forward.5} parent=0 // pred_region
    _
  $region9: #{pos_gated_encoder_forward.5} parent=0 // pred_fallthru
    _
  // Predicated region
  $region10: #{pos_gated_encoder_forward.5} parent=0 // pred_check
    _
  $region11: #{pos_gated_encoder_forward.5} parent=0 // pred_check_branch
    %17 = sbr.rel (0) target = $region13
  $region12: #{pos_gated_encoder_forward.5} parent=0 // pred_region
    _
  $region13: #{pos_gated_encoder_forward.5} parent=0 // pred_fallthru
    _
  // Predicated region
  $region14: #{pos_gated_encoder_forward.5} parent=0 // pred_check
    _
  $region15: #{pos_gated_encoder_forward.5} parent=0 // pred_check_branch
    %19 = sbr.rel (0) target = $region17
  $region16: #{pos_gated_encoder_forward.5} parent=0 // pred_region
    _
  $region17: #{pos_gated_encoder_forward.5} parent=0 // pred_fallthru
    _
  // Predicated region
  $region18: #{pos_gated_encoder_forward.5} parent=0 // pred_check
    _
  $region19: #{pos_gated_encoder_forward.5} parent=0 // pred_check_branch
    %21 = sbr.rel (0) target = $region21
  $region20: #{pos_gated_encoder_forward.5} parent=0 // pred_region
    _
  $region21: #{pos_gated_encoder_forward.5} parent=0 // pred_fallthru
    _
  // Predicated region
  $region22: #{pos_gated_encoder_forward.5} parent=0 // pred_check
    _
  $region23: #{pos_gated_encoder_forward.5} parent=0 // pred_check_branch
    %23 = sbr.rel (0) target = $region25
  $region24: #{pos_gated_encoder_forward.5} parent=0 // pred_region
    _
  $region25: #{pos_gated_encoder_forward.5} parent=0 // pred_fallthru
    _
  // Predicated region
  $region26: #{pos_gated_encoder_forward.5} parent=0 // pred_check
    _
  $region27: #{pos_gated_encoder_forward.5} parent=0 // pred_check_branch
    %25 = sbr.rel (0) target = $region29
  $region28: #{pos_gated_encoder_forward.5} parent=0 // pred_region
    _
  $region29: #{pos_gated_encoder_forward.5} parent=0 // pred_fallthru
    _
  %v27 = vld [vmem:[%s0] sm:$0x3]
  %v28 = vld [vmem:[%s0 + $0x2] sm:$0x3]
  %v29 = vld [vmem:[%s0 + $0x4] sm:$0x3]
  %v30 = vld [vmem:[%s0 + $0x6] sm:$0x3]
  %v31 = vld [vmem:[%s0 + $0x8] sm:$0x3]
  %v32 = vld [vmem:[%s0 + $0xa] sm:$0x3]
  %v33 = vld [vmem:[%s0 + $0xc] sm:$0x3]
  %v34 = vld [vmem:[%s0 + $0xe] sm:$0x3]
  %v35 = vld [vmem:[%s1] sm:$0xff]
  %v36 = vpack.c.bf16 %v35, %v35
  %v37 = vld [vmem:[%s3] sm:$0xf]
  %v38 = vld [vmem:[%s3 + $0x4] sm:$0xf]
  %v41 = vunpack.c.l.b16 %v37
  %v42 = vunpack.c.l.b16 %v38
  %v43 = vpack.c.b16 %v42, %v41
  %vm45 = vcmask 130048
  %v47 = vsel %vm45, %v36, 0
  %49 = vmatprep.subr.bf16.mxu0 0
  %50 = vmatpush1.bf16.msra.mxu0 %v43
  %51 = vmatprep.subr.bf16.mxu0 0
  %52 = vmatpush1.bf16.msra.mxu0 0
  %53 = vmatprep.subr.bf16.mxu0 0
  %54 = vmatpush1.bf16.msra.mxu0 0
  %55 = vmatprep.subr.bf16.mxu0 0
  %56 = vmatpush1.bf16.msra.mxu0 0
  %57 = vmatprep.subr.bf16.mxu0 0
  %58 = vmatpush1.bf16.msra.mxu0 0
  %59 = vmatprep.subr.bf16.mxu0 0
  %60 = vmatpush1.bf16.msra.mxu0 0
  %61 = vmatprep.subr.bf16.mxu0 0
  %62 = vmatpush1.bf16.msra.mxu0 0
  %63 = vmatprep.subr.bf16.mxu0 0
  %64 = vmatpush1.bf16.msra.mxu0 0
  %65 = vmatprep.subr.bf16.mxu0 0
  %66 = vmatpush1.bf16.msra.mxu0 0
  %67 = vmatprep.subr.bf16.mxu0 0
  %68 = vmatpush1.bf16.msra.mxu0 0
  %69 = vmatprep.subr.bf16.mxu0 0
  %70 = vmatpush1.bf16.msra.mxu0 0
  %71 = vmatprep.subr.bf16.mxu0 0
  %72 = vmatpush1.bf16.msra.mxu0 0
  %73 = vmatprep.subr.bf16.mxu0 0
  %74 = vmatpush1.bf16.msra.mxu0 0
  %75 = vmatprep.subr.bf16.mxu0 0
  %76 = vmatpush1.bf16.msra.mxu0 0
  %77 = vmatprep.subr.bf16.mxu0 0
  %78 = vmatpush1.bf16.msra.mxu0 0
  %79 = vmatprep.subr.bf16.mxu0 0
  %80 = vmatpush1.bf16.msra.mxu0 0
  %81 = vmatprep.mubr.bf16.mxu0 0
  %82 = vmatmul.mubr.bf16.gmra.mrb[0].mxu0 %v47
  %v83 = vpop.f32.mrb[0].mxu0
  %v84 = vadd.f32 0.0, %v83
  %v85 = vpop.f32.mrb[0].mxu0
  %v86 = vpop.f32.mrb[0].mxu0
  %v87 = vpop.f32.mrb[0].mxu0
  %88 = vdwg.mxu0
  %v89 = vld [vmem:[%s2] sm:$0x3]
  %v90 = vpack.c.bf16 %v89, %v89
  %v91 = vld [vmem:[%s4] sm:$0xf]
  %v92 = vld [vmem:[%s4 + $0x4] sm:$0xf]
  %v95 = vunpack.c.l.b16 %v91
  %v96 = vunpack.c.l.b16 %v92
  %v97 = vpack.c.b16 %v96, %v95
  %v100 = vsel %vm45, %v90, 0
  %102 = vmatprep.subr.bf16.mxu0 0
  %103 = vmatpush1.bf16.msra.mxu0 %v97
  %104 = vmatprep.subr.bf16.mxu0 0
  %105 = vmatpush1.bf16.msra.mxu0 0
  %106 = vmatprep.subr.bf16.mxu0 0
  %107 = vmatpush1.bf16.msra.mxu0 0
  %108 = vmatprep.subr.bf16.mxu0 0
  %109 = vmatpush1.bf16.msra.mxu0 0
  %110 = vmatprep.subr.bf16.mxu0 0
  %111 = vmatpush1.bf16.msra.mxu0 0
  %112 = vmatprep.subr.bf16.mxu0 0
  %113 = vmatpush1.bf16.msra.mxu0 0
  %114 = vmatprep.subr.bf16.mxu0 0
  %115 = vmatpush1.bf16.msra.mxu0 0
  %116 = vmatprep.subr.bf16.mxu0 0
  %117 = vmatpush1.bf16.msra.mxu0 0
  %118 = vmatprep.subr.bf16.mxu0 0
  %119 = vmatpush1.bf16.msra.mxu0 0
  %120 = vmatprep.subr.bf16.mxu0 0
  %121 = vmatpush1.bf16.msra.mxu0 0
  %122 = vmatprep.subr.bf16.mxu0 0
  %123 = vmatpush1.bf16.msra.mxu0 0
  %124 = vmatprep.subr.bf16.mxu0 0
  %125 = vmatpush1.bf16.msra.mxu0 0
  %126 = vmatprep.subr.bf16.mxu0 0
  %127 = vmatpush1.bf16.msra.mxu0 0
  %128 = vmatprep.subr.bf16.mxu0 0
  %129 = vmatpush1.bf16.msra.mxu0 0
  %130 = vmatprep.subr.bf16.mxu0 0
  %131 = vmatpush1.bf16.msra.mxu0 0
  %132 = vmatprep.subr.bf16.mxu0 0
  %133 = vmatpush1.bf16.msra.mxu0 0
  %134 = vmatprep.mubr.bf16.mxu0 0
  %135 = vmatmul.mubr.bf16.gmra.mrb[0].mxu0 %v100
  %v136 = vpop.f32.mrb[0].mxu0
  %v137 = vadd.f32 0.0, %v136
  %v138 = vpop.f32.mrb[0].mxu0
  %v139 = vpop.f32.mrb[0].mxu0
  %v140 = vpop.f32.mrb[0].mxu0
  %141 = vdwg.mxu0
  %v150 = vcombine.low %v27, %v28
  %v151 = vcombine.low %v29, %v30
  %v153 = vunpack.c.l.s4 1983009808
  %v154 = vunpack.c.0.s8 %v153
  %v155 = vlaneseq
  %v156 = vshrl.u32 %v155, 7
  %v157 = vsub.s32 %v154, %v156
  %v158 = vrot.slane %v150, %v157
  %v160 = vunpack.c.l.s4 1983009808
  %v161 = vunpack.c.0.s8 %v160
  %v162 = vlaneseq
  %v163 = vshrl.u32 %v162, 7
  %v164 = vsub.s32 %v161, %v163
  %v165 = vrot.slane %v151, %v164
  %v166 = vcombine.low %v158, %v165
  %v167 = vcombine.low %v31, %v32
  %v168 = vcombine.low %v33, %v34
  %v170 = vunpack.c.l.s4 1983009808
  %v171 = vunpack.c.0.s8 %v170
  %v172 = vlaneseq
  %v173 = vshrl.u32 %v172, 7
  %v174 = vsub.s32 %v171, %v173
  %v175 = vrot.slane %v167, %v174
  %v177 = vunpack.c.l.s4 1983009808
  %v178 = vunpack.c.0.s8 %v177
  %v179 = vlaneseq
  %v180 = vshrl.u32 %v179, 7
  %v181 = vsub.s32 %v178, %v180
  %v182 = vrot.slane %v168, %v181
  %v183 = vcombine.low %v175, %v182
  %v186 = vpack.c.bf16 %v183, %v166
  %v187 = vld [vmem:[%s5] sm:$0xf]
  %v188 = vld [vmem:[%s5 + $0x4] sm:$0xf]
  %v189 = vld [vmem:[%s5 + $0x8] sm:$0xf]
  %v190 = vld [vmem:[%s5 + $0xc] sm:$0xf]
  %v195 = vunpack.c.l.b16 %v187
  %v196 = vunpack.c.l.b16 %v188
  %v197 = vunpack.c.l.b16 %v189
  %v198 = vunpack.c.l.b16 %v190
  %v199 = vpack.c.b16 %v196, %v195
  %v200 = vpack.c.b16 %v198, %v197
  %vm203 = vcmask 261120
  %v205 = vsel %vm203, %v186, 0
  %207 = vmatprep.subr.bf16.mxu0 0
  %208 = vmatpush1.bf16.msra.mxu0 %v199
  %209 = vmatprep.subr.bf16.mxu0 0
  %210 = vmatpush1.bf16.msra.mxu0 %v200
  %211 = vmatprep.subr.bf16.mxu0 0
  %212 = vmatpush1.bf16.msra.mxu0 0
  %213 = vmatprep.subr.bf16.mxu0 0
  %214 = vmatpush1.bf16.msra.mxu0 0
  %215 = vmatprep.subr.bf16.mxu0 0
  %216 = vmatpush1.bf16.msra.mxu0 0
  %217 = vmatprep.subr.bf16.mxu0 0
  %218 = vmatpush1.bf16.msra.mxu0 0
  %219 = vmatprep.subr.bf16.mxu0 0
  %220 = vmatpush1.bf16.msra.mxu0 0
  %221 = vmatprep.subr.bf16.mxu0 0
  %222 = vmatpush1.bf16.msra.mxu0 0
  %223 = vmatprep.subr.bf16.mxu0 0
  %224 = vmatpush1.bf16.msra.mxu0 0
  %225 = vmatprep.subr.bf16.mxu0 0
  %226 = vmatpush1.bf16.msra.mxu0 0
  %227 = vmatprep.subr.bf16.mxu0 0
  %228 = vmatpush1.bf16.msra.mxu0 0
  %229 = vmatprep.subr.bf16.mxu0 0
  %230 = vmatpush1.bf16.msra.mxu0 0
  %231 = vmatprep.subr.bf16.mxu0 0
  %232 = vmatpush1.bf16.msra.mxu0 0
  %233 = vmatprep.subr.bf16.mxu0 0
  %234 = vmatpush1.bf16.msra.mxu0 0
  %235 = vmatprep.subr.bf16.mxu0 0
  %236 = vmatpush1.bf16.msra.mxu0 0
  %237 = vmatprep.subr.bf16.mxu0 0
  %238 = vmatpush1.bf16.msra.mxu0 0
  %239 = vmatprep.mubr.bf16.mxu0 0
  %240 = vmatmul.mubr.bf16.gmra.mrb[0].mxu0 %v205
  %v241 = vpop.f32.mrb[0].mxu0
  %v242 = vadd.f32 0.0, %v241
  %v243 = vpop.f32.mrb[0].mxu0
  %v244 = vpop.f32.mrb[0].mxu0
  %v245 = vadd.f32 0.0, %v244
  %v246 = vpop.f32.mrb[0].mxu0
  %247 = vdwg.mxu0
  %v250 = vcombine.high %v242, %v242
  %v252 = vunpack.c.l.s4 1983009808
  %v253 = vunpack.c.0.s8 %v252
  %v254 = vlaneseq
  %v255 = vshrl.u32 %v254, 7
  %v256 = vsub.s32 %v253, %v255
  %v257 = vrot.slane %v242, %v256
  %v259 = vunpack.c.l.s4 1983009808
  %v260 = vunpack.c.0.s8 %v259
  %v261 = vlaneseq
  %v262 = vshrl.u32 %v261, 7
  %v263 = vsub.s32 %v260, %v262
  %v264 = vrot.slane %v250, %v263
  %v265 = vcombine.high %v257, %v257
  %v266 = vcombine.high %v264, %v264
  %v267 = vcombine.high %v245, %v245
  %v269 = vunpack.c.l.s4 1983009808
  %v270 = vunpack.c.0.s8 %v269
  %v271 = vlaneseq
  %v272 = vshrl.u32 %v271, 7
  %v273 = vsub.s32 %v270, %v272
  %v274 = vrot.slane %v245, %v273
  %v276 = vunpack.c.l.s4 1983009808
  %v277 = vunpack.c.0.s8 %v276
  %v278 = vlaneseq
  %v279 = vshrl.u32 %v278, 7
  %v280 = vsub.s32 %v277, %v279
  %v281 = vrot.slane %v267, %v280
  %v282 = vcombine.high %v274, %v274
  %v283 = vcombine.high %v281, %v281
  %v293 = vcombine.high %v84, %v84
  %v295 = vunpack.c.l.s4 1966171168
  %v296 = vunpack.c.0.s8 %v295
  %v297 = vlaneseq
  %v298 = vshrl.u32 %v297, 7
  %v299 = vsub.s32 %v296, %v298
  %v300 = vrot.slane %v84, %v299
  %v302 = vunpack.c.l.s4 1966171168
  %v303 = vunpack.c.0.s8 %v302
  %v304 = vlaneseq
  %v305 = vshrl.u32 %v304, 7
  %v306 = vsub.s32 %v303, %v305
  %v307 = vrot.slane %v293, %v306
  %v308 = vcombine.high %v300, %v300
  %v309 = vcombine.high %v307, %v307
  %v311 = vunpack.c.l.s4 1966171168
  %v312 = vunpack.c.0.s8 %v311
  %v313 = vlaneseq
  %v314 = vshrl.u32 %v313, 7
  %v315 = vsub.s32 %v312, %v314
  %v316 = vrot.slane %v300, %v315
  %v318 = vunpack.c.l.s4 1966171168
  %v319 = vunpack.c.0.s8 %v318
  %v320 = vlaneseq
  %v321 = vshrl.u32 %v320, 7
  %v322 = vsub.s32 %v319, %v321
  %v323 = vrot.slane %v307, %v322
  %v325 = vunpack.c.l.s4 1966171168
  %v326 = vunpack.c.0.s8 %v325
  %v327 = vlaneseq
  %v328 = vshrl.u32 %v327, 7
  %v329 = vsub.s32 %v326, %v328
  %v330 = vrot.slane %v308, %v329
  %v332 = vunpack.c.l.s4 1966171168
  %v333 = vunpack.c.0.s8 %v332
  %v334 = vlaneseq
  %v335 = vshrl.u32 %v334, 7
  %v336 = vsub.s32 %v333, %v335
  %v337 = vrot.slane %v309, %v336
  %v338 = vcombine.high %v316, %v316
  %v339 = vcombine.high %v323, %v323
  %v340 = vcombine.high %v330, %v330
  %v341 = vcombine.high %v337, %v337
  %v342 = vlaneseq
  %v343 = vshrl.u32 %v342, 7
  %v344 = vsub.s32 0, %v343
  %v345 = vrot.slane %v316, %v344
  %v346 = vlaneseq
  %v347 = vshrl.u32 %v346, 7
  %v348 = vsub.s32 0, %v347
  %v349 = vrot.slane %v330, %v348
  %v350 = vlaneseq
  %v351 = vshrl.u32 %v350, 7
  %v352 = vsub.s32 0, %v351
  %v353 = vrot.slane %v338, %v352
  %v354 = vlaneseq
  %v355 = vshrl.u32 %v354, 7
  %v356 = vsub.s32 0, %v355
  %v357 = vrot.slane %v340, %v356
  %v358 = vlaneseq
  %v359 = vshrl.u32 %v358, 7
  %v360 = vsub.s32 0, %v359
  %v361 = vrot.slane %v323, %v360
  %v362 = vlaneseq
  %v363 = vshrl.u32 %v362, 7
  %v364 = vsub.s32 0, %v363
  %v365 = vrot.slane %v337, %v364
  %v366 = vlaneseq
  %v367 = vshrl.u32 %v366, 7
  %v368 = vsub.s32 0, %v367
  %v369 = vrot.slane %v339, %v368
  %v370 = vlaneseq
  %v371 = vshrl.u32 %v370, 7
  %v372 = vsub.s32 0, %v371
  %v373 = vrot.slane %v341, %v372
  %v382 = vadd.f32 %v257, %v345
  %v383 = vadd.f32 %v265, %v349
  %v384 = vadd.f32 %v264, %v353
  %v385 = vadd.f32 %v266, %v357
  %v386 = vadd.f32 %v274, %v361
  %v387 = vadd.f32 %v282, %v365
  %v388 = vadd.f32 %v281, %v369
  %v389 = vadd.f32 %v283, %v373
  %v390 = vadd.f32 %v382, %v137
  %v391 = vadd.f32 %v383, %v137
  %v392 = vadd.f32 %v384, %v137
  %v393 = vadd.f32 %v385, %v137
  %v394 = vadd.f32 %v386, %v137
  %v395 = vadd.f32 %v387, %v137
  %v396 = vadd.f32 %v388, %v137
  %v397 = vadd.f32 %v389, %v137
  %v398 = vld [vmem:[%s6] sm:$0x1]
  %v400 = vlaneseq
  %v401 = vshrl.u32 %v400, 7
  %v402 = vsub.s32 0, %v401
  %v403 = vrot.slane %v398, %v402
  %v405 = vadd.f32 %v390, %v403
  %v406 = vadd.f32 %v391, %v403
  %v407 = vadd.f32 %v392, %v403
  %v408 = vadd.f32 %v393, %v403
  %v409 = vadd.f32 %v394, %v403
  %v410 = vadd.f32 %v395, %v403
  %v411 = vadd.f32 %v396, %v403
  %v412 = vadd.f32 %v397, %v403
  %v413 = vxor.u32 %v405, 2147483648
  %v414 = vxor.u32 %v406, 2147483648
  %v415 = vxor.u32 %v407, 2147483648
  %v416 = vxor.u32 %v408, 2147483648
  %v417 = vxor.u32 %v409, 2147483648
  %v418 = vxor.u32 %v410, 2147483648
  %v419 = vxor.u32 %v411, 2147483648
  %v420 = vxor.u32 %v412, 2147483648
  %v421 = vmul.f32 %v413, 1.442695
  %v422 = vpow.pop %v421
  %v423 = vmul.f32 %v414, 1.442695
  %v424 = vpow.pop %v423
  %v425 = vmul.f32 %v415, 1.442695
  %v426 = vpow.pop %v425
  %v427 = vmul.f32 %v416, 1.442695
  %v428 = vpow.pop %v427
  %v429 = vmul.f32 %v417, 1.442695
  %v430 = vpow.pop %v429
  %v431 = vmul.f32 %v418, 1.442695
  %v432 = vpow.pop %v431
  %v433 = vmul.f32 %v419, 1.442695
  %v434 = vpow.pop %v433
  %v435 = vmul.f32 %v420, 1.442695
  %v436 = vpow.pop %v435
  %v437 = vadd.f32 %v422, 1.0
  %v438 = vadd.f32 %v424, 1.0
  %v439 = vadd.f32 %v426, 1.0
  %v440 = vadd.f32 %v428, 1.0
  %v441 = vadd.f32 %v430, 1.0
  %v442 = vadd.f32 %v432, 1.0
  %v443 = vadd.f32 %v434, 1.0
  %v444 = vadd.f32 %v436, 1.0
  %v445 = vrcp.pop %v437
  %v446 = vmul.f32 1.0, %v445
  %v447 = vrcp.pop %v438
  %v448 = vmul.f32 1.0, %v447
  %v449 = vrcp.pop %v439
  %v450 = vmul.f32 1.0, %v449
  %v451 = vrcp.pop %v440
  %v452 = vmul.f32 1.0, %v451
  %v453 = vrcp.pop %v441
  %v454 = vmul.f32 1.0, %v453
  %v455 = vrcp.pop %v442
  %v456 = vmul.f32 1.0, %v455
  %v457 = vrcp.pop %v443
  %v458 = vmul.f32 1.0, %v457
  %v459 = vrcp.pop %v444
  %v460 = vmul.f32 1.0, %v459
  %v461 = vmul.f32 %v27, %v446
  %v462 = vmul.f32 %v28, %v448
  %v463 = vmul.f32 %v29, %v450
  %v464 = vmul.f32 %v30, %v452
  %v465 = vmul.f32 %v31, %v454
  %v466 = vmul.f32 %v32, %v456
  %v467 = vmul.f32 %v33, %v458
  %v468 = vmul.f32 %v34, %v460
  %vm469 = vcmask 254976
  %470 = vst.msk [vmem:[%s7] sm:$0x3] %vm469, %v461
  %471 = vst.msk [vmem:[%s7 + $0x2] sm:$0x3] %vm469, %v462
  %472 = vst.msk [vmem:[%s7 + $0x4] sm:$0x3] %vm469, %v463
  %473 = vst.msk [vmem:[%s7 + $0x6] sm:$0x3] %vm469, %v464
  %474 = vst.msk [vmem:[%s7 + $0x8] sm:$0x3] %vm469, %v465
  %475 = vst.msk [vmem:[%s7 + $0xa] sm:$0x3] %vm469, %v466
  %476 = vst.msk [vmem:[%s7 + $0xc] sm:$0x3] %vm469, %v467
  %477 = vst.msk [vmem:[%s7 + $0xe] sm:$0x3] %vm469, %v468
  // Predicated region
  $region30: #{pos_gated_encoder_forward.5} parent=0 // pred_check
    _
  $region31: #{pos_gated_encoder_forward.5} parent=0 // pred_check_branch
    %479 = sbr.rel (0) target = $region33
  $region32: #{pos_gated_encoder_forward.5} parent=0 // pred_region
    _
  $region33: #{pos_gated_encoder_forward.5} parent=0 // pred_fallthru
    _
  // Predicated region
  $region34: #{pos_gated_encoder_forward.5} parent=0 // pred_check
    _
  $region35: #{pos_gated_encoder_forward.5} parent=0 // pred_check_branch
    %481 = sbr.rel (0) target = $region37
  $region36: #{pos_gated_encoder_forward.5} parent=0 // pred_region
    _
  $region37: #{pos_gated_encoder_forward.5} parent=0 // pred_fallthru
    _

// kernel: pos_gated_encoder_forward.3
$region0: #{pos_gated_encoder_forward.3}
  #allocation0 [shape = 'u32[]', space=smem, size = 0x4, offset = 0x4, fixed_abs, tag = 'smem constant byte address 0x4 - core index']
  #allocation1 [shape = 'u32[144,128]{1,0:T(1,128)}', space=vmem, size = 0x12000, scoped, tag = 'internal scratch']
  #allocation2 [shape = 'f32[8,2,96]{2,1,0:T(2,128)}', space=vmem, size = 0x2000, scoped, tag = 'scratch operand']
  %s0 = inlined_call_operand.vmem [shape: f32[8,2,16], index: 0, kind: input, shape index: {}]
  %s1 = inlined_call_operand.vmem [shape: s32[2,1], index: 1, kind: input, shape index: {}]
  %s2 = inlined_call_operand.vmem [shape: bf16[16,96], index: 2, kind: input, shape index: {}]
  %s3 = inlined_call_operand.vmem [shape: f32[1,96], index: 3, kind: input, shape index: {}]
  %s4 = inlined_call_operand.vmem [shape: f32[16,48], index: 4, kind: input, shape index: {}]
  %s5 = inlined_call_operand.vmem [shape: f32[16,48], index: 5, kind: input, shape index: {}]
  %s6 = inlined_call_operand.vmem [shape: f32[1,16], index: 6, kind: input, shape index: {}]
  %s7 = inlined_call_operand.vmem [shape: f32[1,16], index: 7, kind: input, shape index: {}]
  %s8 = inlined_call_operand.vmem [shape: f32[8,2,32], index: 8, kind: output, shape index: {0}]
  %s9 = inlined_call_operand.vmem [shape: f32[2,2,16], index: 9, kind: output, shape index: {1}]
  %10 = xla_tuple %s8, %s9
  %s11 = sld [smem:[#allocation0]]
  $region57: #{pos_gated_encoder_forward.3} parent=0
    _
  %s13 = ssub.s32 1, %s11
  %s14 = scalar_select 0, %s13, %s11
  // Predicated region
  $region2: #{pos_gated_encoder_forward.3} parent=0 // pred_check
    _
  $region3: #{pos_gated_encoder_forward.3} parent=0 // pred_check_branch
    %16 = sbr.rel (0) target = $region5
  $region4: #{pos_gated_encoder_forward.3} parent=0 // pred_region
    _
  $region5: #{pos_gated_encoder_forward.3} parent=0 // pred_fallthru
    _
  // Predicated region
  $region6: #{pos_gated_encoder_forward.3} parent=0 // pred_check
    _
  $region7: #{pos_gated_encoder_forward.3} parent=0 // pred_check_branch
    %18 = sbr.rel (0) target = $region9
  $region8: #{pos_gated_encoder_forward.3} parent=0 // pred_region
    _
  $region9: #{pos_gated_encoder_forward.3} parent=0 // pred_fallthru
    _
  // Predicated region
  $region10: #{pos_gated_encoder_forward.3} parent=0 // pred_check
    _
  $region11: #{pos_gated_encoder_forward.3} parent=0 // pred_check_branch
    %20 = sbr.rel (0) target = $region13
  $region12: #{pos_gated_encoder_forward.3} parent=0 // pred_region
    _
  $region13: #{pos_gated_encoder_forward.3} parent=0 // pred_fallthru
    _
  // Predicated region
  $region14: #{pos_gated_encoder_forward.3} parent=0 // pred_check
    _
  $region15: #{pos_gated_encoder_forward.3} parent=0 // pred_check_branch
    %22 = sbr.rel (0) target = $region17
  $region16: #{pos_gated_encoder_forward.3} parent=0 // pred_region
    _
  $region17: #{pos_gated_encoder_forward.3} parent=0 // pred_fallthru
    _
  // Predicated region
  $region18: #{pos_gated_encoder_forward.3} parent=0 // pred_check
    _
  $region19: #{pos_gated_encoder_forward.3} parent=0 // pred_check_branch
    %24 = sbr.rel (0) target = $region21
  $region20: #{pos_gated_encoder_forward.3} parent=0 // pred_region
    _
  $region21: #{pos_gated_encoder_forward.3} parent=0 // pred_fallthru
    _
  // Predicated region
  $region22: #{pos_gated_encoder_forward.3} parent=0 // pred_check
    _
  $region23: #{pos_gated_encoder_forward.3} parent=0 // pred_check_branch
    %26 = sbr.rel (0) target = $region25
  $region24: #{pos_gated_encoder_forward.3} parent=0 // pred_region
    _
  $region25: #{pos_gated_encoder_forward.3} parent=0 // pred_fallthru
    _
  // Predicated region
  $region26: #{pos_gated_encoder_forward.3} parent=0 // pred_check
    _
  $region27: #{pos_gated_encoder_forward.3} parent=0 // pred_check_branch
    %28 = sbr.rel (0) target = $region29
  $region28: #{pos_gated_encoder_forward.3} parent=0 // pred_region
    _
  $region29: #{pos_gated_encoder_forward.3} parent=0 // pred_fallthru
    _
  // Predicated region
  $region30: #{pos_gated_encoder_forward.3} parent=0 // pred_check
    _
  $region31: #{pos_gated_encoder_forward.3} parent=0 // pred_check_branch
    %30 = sbr.rel (0) target = $region33
  $region32: #{pos_gated_encoder_forward.3} parent=0 // pred_region
    _
  $region33: #{pos_gated_encoder_forward.3} parent=0 // pred_fallthru
    _
  %v32 = vld [vmem:[%s0] sm:$0x3]
  %v33 = vld [vmem:[%s0 + $0x2] sm:$0x3]
  %v34 = vld [vmem:[%s0 + $0x4] sm:$0x3]
  %v35 = vld [vmem:[%s0 + $0x6] sm:$0x3]
  %v36 = vld [vmem:[%s0 + $0x8] sm:$0x3]
  %v37 = vld [vmem:[%s0 + $0xa] sm:$0x3]
  %v38 = vld [vmem:[%s0 + $0xc] sm:$0x3]
  %v39 = vld [vmem:[%s0 + $0xe] sm:$0x3]
  %v48 = vcombine.low %v32, %v33
  %v49 = vcombine.low %v34, %v35
  %v51 = vunpack.c.l.s4 1983009808
  %v52 = vunpack.c.0.s8 %v51
  %v53 = vlaneseq
  %v54 = vshrl.u32 %v53, 7
  %v55 = vsub.s32 %v52, %v54
  %v56 = vrot.slane %v48, %v55
  %v58 = vunpack.c.l.s4 1983009808
  %v59 = vunpack.c.0.s8 %v58
  %v60 = vlaneseq
  %v61 = vshrl.u32 %v60, 7
  %v62 = vsub.s32 %v59, %v61
  %v63 = vrot.slane %v49, %v62
  %v64 = vcombine.low %v56, %v63
  %v65 = vcombine.low %v36, %v37
  %v66 = vcombine.low %v38, %v39
  %v68 = vunpack.c.l.s4 1983009808
  %v69 = vunpack.c.0.s8 %v68
  %v70 = vlaneseq
  %v71 = vshrl.u32 %v70, 7
  %v72 = vsub.s32 %v69, %v71
  %v73 = vrot.slane %v65, %v72
  %v75 = vunpack.c.l.s4 1983009808
  %v76 = vunpack.c.0.s8 %v75
  %v77 = vlaneseq
  %v78 = vshrl.u32 %v77, 7
  %v79 = vsub.s32 %v76, %v78
  %v80 = vrot.slane %v66, %v79
  %v81 = vcombine.low %v73, %v80
  %v84 = vpack.c.bf16 %v81, %v64
  %v85 = vld [vmem:[%s2] sm:$0xf]
  %v86 = vld [vmem:[%s2 + $0x4] sm:$0xf]
  %v87 = vld [vmem:[%s3] sm:$0x1]
  %v89 = vlaneseq
  %v90 = vshrl.u32 %v89, 7
  %v91 = vsub.s32 0, %v90
  %v92 = vrot.slane %v87, %v91
  %v96 = vunpack.c.l.b16 %v85
  %v97 = vunpack.c.l.b16 %v86
  %v98 = vpack.c.b16 %v97, %v96
  %vm100 = vcmask 130048
  %v102 = vsel %vm100, %v84, 0
  %104 = vmatprep.subr.bf16.mxu0 0
  %105 = vmatpush1.bf16.msra.mxu0 %v98
  %106 = vmatprep.subr.bf16.mxu0 0
  %107 = vmatpush1.bf16.msra.mxu0 0
  %108 = vmatprep.subr.bf16.mxu0 0
  %109 = vmatpush1.bf16.msra.mxu0 0
  %110 = vmatprep.subr.bf16.mxu0 0
  %111 = vmatpush1.bf16.msra.mxu0 0
  %112 = vmatprep.subr.bf16.mxu0 0
  %113 = vmatpush1.bf16.msra.mxu0 0
  %114 = vmatprep.subr.bf16.mxu0 0
  %115 = vmatpush1.bf16.msra.mxu0 0
  %116 = vmatprep.subr.bf16.mxu0 0
  %117 = vmatpush1.bf16.msra.mxu0 0
  %118 = vmatprep.subr.bf16.mxu0 0
  %119 = vmatpush1.bf16.msra.mxu0 0
  %120 = vmatprep.subr.bf16.mxu0 0
  %121 = vmatpush1.bf16.msra.mxu0 0
  %122 = vmatprep.subr.bf16.mxu0 0
  %123 = vmatpush1.bf16.msra.mxu0 0
  %124 = vmatprep.subr.bf16.mxu0 0
  %125 = vmatpush1.bf16.msra.mxu0 0
  %126 = vmatprep.subr.bf16.mxu0 0
  %127 = vmatpush1.bf16.msra.mxu0 0
  %128 = vmatprep.subr.bf16.mxu0 0
  %129 = vmatpush1.bf16.msra.mxu0 0
  %130 = vmatprep.subr.bf16.mxu0 0
  %131 = vmatpush1.bf16.msra.mxu0 0
  %132 = vmatprep.subr.bf16.mxu0 0
  %133 = vmatpush1.bf16.msra.mxu0 0
  %134 = vmatprep.subr.bf16.mxu0 0
  %135 = vmatpush1.bf16.msra.mxu0 0
  %136 = vmatprep.mubr.bf16.mxu0 0
  %137 = vmatmul.mubr.bf16.gmra.mrb[0].mxu0 %v102
  %v138 = vpop.f32.mrb[0].mxu0
  %v139 = vadd.f32 %v92, %v138
  %v140 = vpop.f32.mrb[0].mxu0
  %v141 = vpop.f32.mrb[0].mxu0
  %v142 = vadd.f32 %v92, %v141
  %v143 = vpop.f32.mrb[0].mxu0
  %144 = vdwg.mxu0
  %v147 = vcombine.high %v139, %v139
  %v149 = vunpack.c.l.s4 1983009808
  %v150 = vunpack.c.0.s8 %v149
  %v151 = vlaneseq
  %v152 = vshrl.u32 %v151, 7
  %v153 = vsub.s32 %v150, %v152
  %v154 = vrot.slane %v139, %v153
  %v156 = vunpack.c.l.s4 1983009808
  %v157 = vunpack.c.0.s8 %v156
  %v158 = vlaneseq
  %v159 = vshrl.u32 %v158, 7
  %v160 = vsub.s32 %v157, %v159
  %v161 = vrot.slane %v147, %v160
  %v162 = vcombine.high %v154, %v154
  %v163 = vcombine.high %v161, %v161
  %v164 = vcombine.high %v142, %v142
  %v166 = vunpack.c.l.s4 1983009808
  %v167 = vunpack.c.0.s8 %v166
  %v168 = vlaneseq
  %v169 = vshrl.u32 %v168, 7
  %v170 = vsub.s32 %v167, %v169
  %v171 = vrot.slane %v142, %v170
  %v173 = vunpack.c.l.s4 1983009808
  %v174 = vunpack.c.0.s8 %v173
  %v175 = vlaneseq
  %v176 = vshrl.u32 %v175, 7
  %v177 = vsub.s32 %v174, %v176
  %v178 = vrot.slane %v164, %v177
  %v179 = vcombine.high %v171, %v171
  %v180 = vcombine.high %v178, %v178
  %vm189 = vcmask 779264
  %190 = vst.msk [vmem:[#allocation2] sm:$0x3] %vm189, %v154
  %191 = vst.msk [vmem:[#allocation2 + $0x2] sm:$0x3] %vm189, %v162
  %192 = vst.msk [vmem:[#allocation2 + $0x4] sm:$0x3] %vm189, %v161
  %193 = vst.msk [vmem:[#allocation2 + $0x6] sm:$0x3] %vm189, %v163
  %194 = vst.msk [vmem:[#allocation2 + $0x8] sm:$0x3] %vm189, %v171
  %195 = vst.msk [vmem:[#allocation2 + $0xa] sm:$0x3] %vm189, %v179
  %196 = vst.msk [vmem:[#allocation2 + $0xc] sm:$0x3] %vm189, %v178
  %197 = vst.msk [vmem:[#allocation2 + $0xe] sm:$0x3] %vm189, %v180
  %v198 = vld [vmem:[%s1] sm:$0x3]
  %v199 = vld [vmem:[%s4] sm:$0xff]
  %v200 = vld [vmem:[%s4 + $0x8] sm:$0xff]
  %v201 = vld [vmem:[%s5] sm:$0xff]
  %v202 = vld [vmem:[%s5 + $0x8] sm:$0xff]
  %v203 = vld [vmem:[%s6] sm:$0x1]
  %v205 = vlaneseq
  %v206 = vshrl.u32 %v205, 7
  %v207 = vsub.s32 0, %v206
  %v208 = vrot.slane %v203, %v207
  %v209 = vld [vmem:[%s7] sm:$0x1]
  %v211 = vlaneseq
  %v212 = vshrl.u32 %v211, 7
  %v213 = vsub.s32 0, %v212
  %v214 = vrot.slane %v209, %v213
  loop: start=0, step=1, limit=8
  $region34: #{pos_gated_encoder_forward.3} parent=0 // loop_pre_header
    _
  $region35: #{pos_gated_encoder_forward.3} parent=0 // loop_header
    %s216 = sphi 0, %s220
    %p217 = scmp.ge.s32.totalorder %s216, 8
    %v221 = vphi 0.0, %v453
    %v222 = vphi 0.0, %v459
  $region36: #{pos_gated_encoder_forward.3} parent=0 // loop_header_branch
    %219 = sbr.rel (%p217) target = $region40
  $region37: #{pos_gated_encoder_forward.3} parent=0 // loop_body
    %s223 = ssub.s32 7, %s216
    %s224 = smul.u32 %s216, 2
    %s225 = scalar_lea.vmem [#allocation2], %s224
    %v226 = vld [vmem:[%s225] sm:$0x3]
    %s227 = smul.u32 %s223, 2
    %s228 = scalar_lea.vmem [#allocation2], %s227
    %v229 = vld [vmem:[%s228] sm:$0x3]
    %231 = vrot.lane.b32.xlu0 %v221, 112
    %v232 = vpop.permute.xlu0 %231
    %v233 = vsel %vm100, %v232, 0
    %235 = vmatprep.subr.mxu0 0.0
    %236 = vmatpush1.msra.mxu0 %v199
    %237 = vmatprep.subr.mxu0 0.0
    %238 = vmatpush1.msra.mxu0 %v200
    %239 = vmatprep.subr.mxu0 0.0
    %240 = vmatpush1.msra.mxu0 0.0
    %241 = vmatprep.subr.mxu0 0.0
    %242 = vmatpush1.msra.mxu0 0.0
    %243 = vmatprep.subr.mxu0 0.0
    %244 = vmatpush1.msra.mxu0 0.0
    %245 = vmatprep.subr.mxu0 0.0
    %246 = vmatpush1.msra.mxu0 0.0
    %247 = vmatprep.subr.mxu0 0.0
    %248 = vmatpush1.msra.mxu0 0.0
    %249 = vmatprep.subr.mxu0 0.0
    %250 = vmatpush1.msra.mxu0 0.0
    %251 = vmatprep.subr.mxu0 0.0
    %252 = vmatpush1.msra.mxu0 0.0
    %253 = vmatprep.subr.mxu0 0.0
    %254 = vmatpush1.msra.mxu0 0.0
    %255 = vmatprep.subr.mxu0 0.0
    %256 = vmatpush1.msra.mxu0 0.0
    %257 = vmatprep.subr.mxu0 0.0
    %258 = vmatpush1.msra.mxu0 0.0
    %259 = vmatprep.subr.mxu0 0.0
    %260 = vmatpush1.msra.mxu0 0.0
    %261 = vmatprep.subr.mxu0 0.0
    %262 = vmatpush1.msra.mxu0 0.0
    %263 = vmatprep.subr.mxu0 0.0
    %264 = vmatpush1.msra.mxu0 0.0
    %265 = vmatprep.subr.mxu0 0.0
    %266 = vmatpush1.msra.mxu0 0.0
    %267 = vmatprep.subr.mxu0 0.0
    %268 = vmatpush1.msra.mxu0 0.0
    %269 = vmatprep.subr.mxu0 0.0
    %270 = vmatpush1.msra.mxu0 0.0
    %271 = vmatprep.subr.mxu0 0.0
    %272 = vmatpush1.msra.mxu0 0.0
    %273 = vmatprep.subr.mxu0 0.0
    %274 = vmatpush1.msra.mxu0 0.0
    %275 = vmatprep.subr.mxu0 0.0
    %276 = vmatpush1.msra.mxu0 0.0
    %277 = vmatprep.subr.mxu0 0.0
    %278 = vmatpush1.msra.mxu0 0.0
    %279 = vmatprep.subr.mxu0 0.0
    %280 = vmatpush1.msra.mxu0 0.0
    %281 = vmatprep.subr.mxu0 0.0
    %282 = vmatpush1.msra.mxu0 0.0
    %283 = vmatprep.subr.mxu0 0.0
    %284 = vmatpush1.msra.mxu0 0.0
    %285 = vmatprep.subr.mxu0 0.0
    %286 = vmatpush1.msra.mxu0 0.0
    %287 = vmatprep.subr.mxu0 0.0
    %288 = vmatpush1.msra.mxu0 0.0
    %289 = vmatprep.subr.mxu0 0.0
    %290 = vmatpush1.msra.mxu0 0.0
    %291 = vmatprep.subr.mxu0 0.0
    %292 = vmatpush1.msra.mxu0 0.0
    %293 = vmatprep.subr.mxu0 0.0
    %294 = vmatpush1.msra.mxu0 0.0
    %295 = vmatprep.subr.mxu0 0.0
    %296 = vmatpush1.msra.mxu0 0.0
    %297 = vmatprep.subr.mxu0 0.0
    %298 = vmatpush1.msra.mxu0 0.0
    %299 = vmatprep.mubr.f32.mxu0 0.0
    %300 = vmatmul.mubr.f32.gmra.mrb[0].mxu0 %v233
    %v301 = vpop.f32.mrb[0].mxu0
    %v302 = vadd.f32 0.0, %v301
    %v303 = vpop.f32.mrb[0].mxu0
    %304 = vdwg.mxu0
    %306 = vrot.lane.b32.xlu0 %v222, 64
    %v307 = vpop.permute.xlu0 %306
    %v308 = vsel %vm100, %v307, 0
    %310 = vmatprep.subr.mxu0 0.0
    %311 = vmatpush1.msra.mxu0 %v201
    %312 = vmatprep.subr.mxu0 0.0
    %313 = vmatpush1.msra.mxu0 %v202
    %314 = vmatprep.subr.mxu0 0.0
    %315 = vmatpush1.msra.mxu0 0.0
    %316 = vmatprep.subr.mxu0 0.0
    %317 = vmatpush1.msra.mxu0 0.0
    %318 = vmatprep.subr.mxu0 0.0
    %319 = vmatpush1.msra.mxu0 0.0
    %320 = vmatprep.subr.mxu0 0.0
    %321 = vmatpush1.msra.mxu0 0.0
    %322 = vmatprep.subr.mxu0 0.0
    %323 = vmatpush1.msra.mxu0 0.0
    %324 = vmatprep.subr.mxu0 0.0
    %325 = vmatpush1.msra.mxu0 0.0
    %326 = vmatprep.subr.mxu0 0.0
    %327 = vmatpush1.msra.mxu0 0.0
    %328 = vmatprep.subr.mxu0 0.0
    %329 = vmatpush1.msra.mxu0 0.0
    %330 = vmatprep.subr.mxu0 0.0
    %331 = vmatpush1.msra.mxu0 0.0
    %332 = vmatprep.subr.mxu0 0.0
    %333 = vmatpush1.msra.mxu0 0.0
    %334 = vmatprep.subr.mxu0 0.0
    %335 = vmatpush1.msra.mxu0 0.0
    %336 = vmatprep.subr.mxu0 0.0
    %337 = vmatpush1.msra.mxu0 0.0
    %338 = vmatprep.subr.mxu0 0.0
    %339 = vmatpush1.msra.mxu0 0.0
    %340 = vmatprep.subr.mxu0 0.0
    %341 = vmatpush1.msra.mxu0 0.0
    %342 = vmatprep.subr.mxu0 0.0
    %343 = vmatpush1.msra.mxu0 0.0
    %344 = vmatprep.subr.mxu0 0.0
    %345 = vmatpush1.msra.mxu0 0.0
    %346 = vmatprep.subr.mxu0 0.0
    %347 = vmatpush1.msra.mxu0 0.0
    %348 = vmatprep.subr.mxu0 0.0
    %349 = vmatpush1.msra.mxu0 0.0
    %350 = vmatprep.subr.mxu0 0.0
    %351 = vmatpush1.msra.mxu0 0.0
    %352 = vmatprep.subr.mxu0 0.0
    %353 = vmatpush1.msra.mxu0 0.0
    %354 = vmatprep.subr.mxu0 0.0
    %355 = vmatpush1.msra.mxu0 0.0
    %356 = vmatprep.subr.mxu0 0.0
    %357 = vmatpush1.msra.mxu0 0.0
    %358 = vmatprep.subr.mxu0 0.0
    %359 = vmatpush1.msra.mxu0 0.0
    %360 = vmatprep.subr.mxu0 0.0
    %361 = vmatpush1.msra.mxu0 0.0
    %362 = vmatprep.subr.mxu0 0.0
    %363 = vmatpush1.msra.mxu0 0.0
    %364 = vmatprep.subr.mxu0 0.0
    %365 = vmatpush1.msra.mxu0 0.0
    %366 = vmatprep.subr.mxu0 0.0
    %367 = vmatpush1.msra.mxu0 0.0
    %368 = vmatprep.subr.mxu0 0.0
    %369 = vmatpush1.msra.mxu0 0.0
    %370 = vmatprep.subr.mxu0 0.0
    %371 = vmatpush1.msra.mxu0 0.0
    %372 = vmatprep.subr.mxu0 0.0
    %373 = vmatpush1.msra.mxu0 0.0
    %374 = vmatprep.mubr.f32.mxu0 0.0
    %375 = vmatmul.mubr.f32.gmra.mrb[0].mxu0 %v308
    %v376 = vpop.f32.mrb[0].mxu0
    %v377 = vadd.f32 0.0, %v376
    %v378 = vpop.f32.mrb[0].mxu0
    %379 = vdwg.mxu0
    %v380 = vadd.f32 %v226, %v302
    %v381 = vxor.u32 %v380, 2147483648
    %v382 = vmul.f32 %v381, 1.442695
    %v383 = vpow.pop %v382
    %v384 = vadd.f32 %v383, 1.0
    %v385 = vrcp.pop %v384
    %v386 = vmul.f32 1.0, %v385
    %387 = vrot.lane.b32.xlu0 %v208, 32
    %v388 = vpop.permute.xlu0 %387
    %v390 = vadd.f32 %v302, %v388
    %392 = vrot.lane.b32.xlu0 %v390, 96
    %v393 = vpop.permute.xlu0 %392
    %v395 = vmul.f32 %v386, %v393
    %397 = vrot.lane.b32.xlu0 %v395, 32
    %v398 = vpop.permute.xlu0 %397
    %v400 = vadd.f32 %v226, %v398
    %v401 = vtanh.pop %v400
    %v402 = vsub.f32 1.0, %v386
    %404 = vrot.lane.b32.xlu0 %v401, 112
    %v405 = vpop.permute.xlu0 %404
    %v407 = vmul.f32 %v402, %v405
    %v408 = vmul.f32 %v386, %v221
    %v409 = vadd.f32 %v407, %v408
    %411 = vrot.lane.b32.xlu0 %v377, 48
    %v412 = vpop.permute.xlu0 %411
    %v414 = vadd.f32 %v229, %v412
    %v415 = vxor.u32 %v414, 2147483648
    %v416 = vmul.f32 %v415, 1.442695
    %v417 = vpow.pop %v416
    %v418 = vadd.f32 %v417, 1.0
    %v419 = vrcp.pop %v418
    %v420 = vmul.f32 1.0, %v419
    %421 = vrot.lane.b32.xlu0 %v214, 32
    %v422 = vpop.permute.xlu0 %421
    %v424 = vadd.f32 %v377, %v422
    %426 = vrot.lane.b32.xlu0 %v424, 16
    %v427 = vpop.permute.xlu0 %426
    %v429 = vmul.f32 %v420, %v427
    %431 = vrot.lane.b32.xlu0 %v429, 32
    %v432 = vpop.permute.xlu0 %431
    %v434 = vadd.f32 %v229, %v432
    %v435 = vtanh.pop %v434
    %v436 = vsub.f32 1.0, %v420
    %438 = vrot.lane.b32.xlu0 %v435, 112
    %v439 = vpop.permute.xlu0 %438
    %v441 = vmul.f32 %v436, %v439
    %v442 = vmul.f32 %v420, %v222
    %v443 = vadd.f32 %v441, %v442
    %v444 = vstv %s216
    %vm445 = vcmp.lt.s32.totalorder %v444, %v198
    %v446 = vstv %s223
    %vm447 = vcmp.lt.s32.totalorder %v446, %v198
    %v448 = vsel %vm445, 1, 0
    %449 = vset.pattern.permute.xlu0 0
    %450 = vperm.xlu0 %449, %v448
    %v451 = vpop.permute.xlu0 %450
    %vm452 = vcmp.eq.s32.totalorder %v451, 1
    %v453 = vsel %vm452, %v409, %v221
    %v454 = vsel %vm447, 1, 0
    %455 = vset.pattern.permute.xlu0 0
    %456 = vperm.xlu0 %455, %v454
    %v457 = vpop.permute.xlu0 %456
    %vm458 = vcmp.eq.s32.totalorder %v457, 1
    %v459 = vsel %vm458, %v443, %v222
    %v460 = vsel %vm452, %v409, 0.0
    %462 = vrot.lane.b32.xlu0 %v460, 112
    %v463 = vpop.permute.xlu0 %462
    %s465 = scalar_lea.vmem %s8, %s224
    %vm466 = vcmask 123904
    %467 = vst.msk [vmem:[%s465] sm:$0x3] %vm466, %v463
    %v468 = vsel %vm458, %v443, 0.0
    %470 = vrot.lane.b32.xlu0 %v468, 80
    %v471 = vpop.permute.xlu0 %470
    %s473 = scalar_lea.vmem %s8, %s227
    %vm474 = vcmask 255104
    %475 = vst.msk [vmem:[%s473] sm:$0x3] %vm474, %v471
  $region38: #{pos_gated_encoder_forward.3} parent=0 // loop_footer
    %s220 = sadd.s32 1, %s216
  $region39: #{pos_gated_encoder_forward.3} parent=0 // loop_footer_branch
    %215 = sbr.rel target = $region35
  $region40: #{pos_gated_encoder_forward.3} parent=0 // loop_exit
    _
  %477 = vrot.lane.b32.xlu0 %v221, 112
  %v478 = vpop.permute.xlu0 %477
  %vm480 = vcmask 123904
  %481 = vst.msk [vmem:[%s9] sm:$0x3] %vm480, %v478
  %483 = vrot.lane.b32.xlu0 %v222, 64
  %v484 = vpop.permute.xlu0 %483
  %s486 = scalar_lea.vmem %s9, 2
  %487 = vst.msk [vmem:[%s486] sm:$0x3] %vm480, %v484
  // Predicated region
  $region41: #{pos_gated_encoder_forward.3} parent=0 // pred_check
    _
  $region42: #{pos_gated_encoder_forward.3} parent=0 // pred_check_branch
    %489 = sbr.rel (0) target = $region44
  $region43: #{pos_gated_encoder_forward.3} parent=0 // pred_region
    _
  $region44: #{pos_gated_encoder_forward.3} parent=0 // pred_fallthru
    _
  // Predicated region
  $region45: #{pos_gated_encoder_forward.3} parent=0 // pred_check
    _
  $region46: #{pos_gated_encoder_forward.3} parent=0 // pred_check_branch
    %491 = sbr.rel (0) target = $region48
  $region47: #{pos_gated_encoder_forward.3} parent=0 // pred_region
    _
  $region48: #{pos_gated_encoder_forward.3} parent=0 // pred_fallthru
    _
  // Predicated region
  $region49: #{pos_gated_encoder_forward.3} parent=0 // pred_check
    _
  $region50: #{pos_gated_encoder_forward.3} parent=0 // pred_check_branch
    %493 = sbr.rel (0) target = $region52
  $region51: #{pos_gated_encoder_forward.3} parent=0 // pred_region
    _
  $region52: #{pos_gated_encoder_forward.3} parent=0 // pred_fallthru
    _
  // Predicated region
  $region53: #{pos_gated_encoder_forward.3} parent=0 // pred_check
    _
  $region54: #{pos_gated_encoder_forward.3} parent=0 // pred_check_branch
    %495 = sbr.rel (0) target = $region56
  $region55: #{pos_gated_encoder_forward.3} parent=0 // pred_region
    _
  $region56: #{pos_gated_encoder_forward.3} parent=0 // pred_fallthru
    _

</llo_original>
